<compile_context>
chip_gen: v7x
topology: tpu7x:2x2x1
jax: 0.10.0
libtpu: 0.0.40
codegen_flags: <defaults>
</compile_context>

<pallas_src>
import functools

import jax
import jax.numpy as jnp
from jax.experimental import pallas as pl
from jax.experimental.pallas import tpu as pltpu

_SINGLE_PASS_MAX_NPAD = 2048   # padded node dim up to which the one-step path is used
_NEG_BIG = -1e30               # finite "-inf": keeps exp()==0 without inf-inf NaNs


def _round_up(x, m):
    return (x + m - 1) // m * m


def _vmem_budget_bytes():
    """Generation-aware VMEM budget (~48 MiB on v7x, ~96 MiB on v5e/v6e)."""
    try:
        cap = pltpu.get_tpu_info().vmem_capacity_bytes
    except Exception:
        cap = 64 * 1024 * 1024          # assume the most constrained chip (v7x per-TC)
    return int(min(0.75 * cap, 100 * 1024 * 1024))


# --------------------------------------------------------------------------------------
# Kernels
# --------------------------------------------------------------------------------------

def deepwalk_single_pass_kernel(x_ref, w1_ref, w2_ref, b2_ref, out_ref):
    """Small node_num: one step does both matmuls and the full-row log_softmax."""
    h = jnp.dot(x_ref[...], w1_ref[...], preferred_element_type=jnp.float32)
    logits = jnp.dot(h.astype(jnp.bfloat16), w2_ref[...],
                     preferred_element_type=jnp.float32) + b2_ref[...]
    m = jnp.max(logits, axis=-1, keepdims=True)
    l = jnp.sum(jnp.exp(logits - m), axis=-1, keepdims=True)
    out_ref[...] = (logits - (m + jnp.log(l))).astype(out_ref.dtype)


def deepwalk_tiled_kernel(x_ref, w1_ref, w2_ref, b2_ref, out_ref,
                          h_acc, h_bf16, m_acc, l_acc, logit_slab, *, num_n):
    phase = pl.program_id(1)
    n = pl.program_id(2)

    # ---- phase 0: accumulate h = x @ w1 over node (K) tiles; cache bf16 copy once ----
    @pl.when(phase == 0)
    def _():
        @pl.when(n == 0)
        def _():
            h_acc[...] = jnp.zeros_like(h_acc)
        h_acc[...] += jnp.dot(x_ref[...], w1_ref[...],
                              preferred_element_type=jnp.float32)

        @pl.when(n == num_n - 1)
        def _():
            h_bf16[...] = h_acc[...].astype(jnp.bfloat16)

    # ---- phase 1: logits tile -> VMEM slab + online running max / sum-exp ------------
    @pl.when(phase == 1)
    def _():
        @pl.when(n == 0)
        def _():
            m_acc[...] = jnp.full_like(m_acc, _NEG_BIG)
            l_acc[...] = jnp.zeros_like(l_acc)
        logits = jnp.dot(h_bf16[...], w2_ref[...],
                         preferred_element_type=jnp.float32) + b2_ref[...]
        logit_slab[n] = logits
        m_new = jnp.maximum(m_acc[...], jnp.max(logits, axis=-1, keepdims=True))
        l_acc[...] = (l_acc[...] * jnp.exp(m_acc[...] - m_new)
                      + jnp.sum(jnp.exp(logits - m_new), axis=-1, keepdims=True))
        m_acc[...] = m_new

    # ---- phase 2: pure elementwise writeback from the slab (no matmul, no restream) --
    @pl.when(phase == 2)
    def _():
        lse = m_acc[...] + jnp.log(l_acc[...])
        out_ref[...] = (logit_slab[n] - lse).astype(out_ref.dtype)


# --------------------------------------------------------------------------------------
# pallas_call wrappers
# --------------------------------------------------------------------------------------

def _single_pass_call(x_pad, w1, w2, b2, *, tb, out_dtype, vmem_limit):
    Bpad, Npad = x_pad.shape
    hidden = w1.shape[1]
    num_b = Bpad // tb
    cost = pl.CostEstimate(
        flops=4 * Bpad * Npad * hidden,
        transcendentals=Bpad * Npad,
        bytes_accessed=(Bpad * Npad * 2 + 2 * Npad * hidden * 2 + Npad * 4
                        + Bpad * Npad * jnp.dtype(out_dtype).itemsize))
    return pl.pallas_call(
        deepwalk_single_pass_kernel,
        out_shape=jax.ShapeDtypeStruct((Bpad, Npad), out_dtype),
        grid_spec=pltpu.PrefetchScalarGridSpec(
            num_scalar_prefetch=0,
            grid=(num_b,),
            in_specs=[
                pl.BlockSpec((tb, Npad), lambda b: (b, 0)),
                pl.BlockSpec((Npad, hidden), lambda b: (0, 0)),
                pl.BlockSpec((hidden, Npad), lambda b: (0, 0)),
                pl.BlockSpec((1, Npad), lambda b: (0, 0)),
            ],
            out_specs=pl.BlockSpec((tb, Npad), lambda b: (b, 0)),
        ),
        compiler_params=pltpu.CompilerParams(
            dimension_semantics=("parallel",),
            vmem_limit_bytes=vmem_limit),
        cost_estimate=cost,
    )(x_pad, w1, w2, b2)


def _tiled_call(x_pad, w1, w2, b2, *, tb, tn, out_dtype, vmem_limit):
    Bpad, Npad = x_pad.shape
    hidden = w1.shape[1]
    num_b, num_n = Bpad // tb, Npad // tn
    last = num_n - 1
    kernel = functools.partial(deepwalk_tiled_kernel, num_n=num_n)
    cost = pl.CostEstimate(
        flops=4 * Bpad * Npad * hidden,
        transcendentals=Bpad * Npad,
        bytes_accessed=(Bpad * Npad * 2
                        + num_b * (2 * Npad * hidden * 2 + Npad * 4)
                        + Bpad * Npad * jnp.dtype(out_dtype).itemsize))
    return pl.pallas_call(
        kernel,
        out_shape=jax.ShapeDtypeStruct((Bpad, Npad), out_dtype),
        grid_spec=pltpu.PrefetchScalarGridSpec(
            num_scalar_prefetch=0,
            grid=(num_b, 3, num_n),
            in_specs=[
                # x: stream K tiles in phase 0, then stay pinned on the last tile
                pl.BlockSpec((tb, tn),
                             lambda b, p, n: (b, jnp.where(p == 0, n, last))),
                # w1: same schedule as x
                pl.BlockSpec((tn, hidden),
                             lambda b, p, n: (jnp.where(p == 0, n, last), 0)),
                # w2/bias: prefetch block 0 during phase 0, stream in phase 1,
                # stay pinned on the last tile during phase 2 (slab path, no restream)
                pl.BlockSpec((hidden, tn),
                             lambda b, p, n: (0, jnp.where(p == 1, n,
                                                           jnp.where(p == 2, last, 0)))),
                pl.BlockSpec((1, tn),
                             lambda b, p, n: (0, jnp.where(p == 1, n,
                                                           jnp.where(p == 2, last, 0)))),
            ],
            # out: only advances during phase 2 -> one lane-dense writeback per tile
            out_specs=pl.BlockSpec((tb, tn),
                                   lambda b, p, n: (b, jnp.where(p == 2, n, 0))),
            scratch_shapes=[
                pltpu.VMEM((tb, hidden), jnp.float32),     # h accumulator (f32)
                pltpu.VMEM((tb, hidden), jnp.bfloat16),    # h cached once as bf16
                pltpu.VMEM((tb, 1), jnp.float32),          # running max
                pltpu.VMEM((tb, 1), jnp.float32),          # running sum-exp
                pltpu.VMEM((num_n, tb, tn), jnp.float32),  # logits slab (kills recompute)
            ],
        ),
        compiler_params=pltpu.CompilerParams(
            dimension_semantics=("parallel", "arbitrary", "arbitrary"),
            vmem_limit_bytes=vmem_limit),
        cost_estimate=cost,
    )(x_pad, w1, w2, b2)


# --------------------------------------------------------------------------------------
# Host-side wrappers
# --------------------------------------------------------------------------------------

def prepare_params(w_in, w_out, b_out):
    """One-time layout prep: transpose to (in, out), cast to bf16, pad node dim.

    Padded bias columns are poisoned to a finite -1e30 so padded logits drop out of the
    softmax without any per-tile masking inside the kernel.
    """
    hidden, node_num = w_in.shape
    n128 = _round_up(node_num, 128)
    Npad = n128 if n128 <= _SINGLE_PASS_MAX_NPAD else _round_up(node_num, 512)
    w1 = jnp.zeros((Npad, hidden), jnp.bfloat16).at[:node_num, :].set(
        w_in.T.astype(jnp.bfloat16))
    w2 = jnp.zeros((hidden, Npad), jnp.bfloat16).at[:, :node_num].set(
        w_out.T.astype(jnp.bfloat16))
    b2 = jnp.full((1, Npad), _NEG_BIG, jnp.float32).at[:, :node_num].set(
        b_out.astype(jnp.float32)[None, :])
    return w1, w2, b2


def _tiled_vmem_bytes(tb, tn, n_pad, hidden):
    buffers = 2 * (tb * tn * 2 + tn * hidden * 2 + hidden * tn * 2 + tn * 4
                   + tb * tn * 4)
    scratch = tb * hidden * 6 + 2 * tb * 4 + tb * n_pad * 4
    return buffers + scratch


@functools.partial(jax.jit, static_argnames=("force_tiled", "tile_n", "out_dtype"))
def deepwalk_forward(x, w1, w2, b2, *, force_tiled=False, tile_n=None,
                     out_dtype=jnp.float32):
    """log_softmax((x @ w1) @ w2 + b2) with padded params from prepare_params().

    out_dtype=jnp.bfloat16 roughly halves HBM write traffic if reduced log-prob
    precision is acceptable downstream.
    """
    B, node_num = x.shape
    Npad = w2.shape[1]
    budget = _vmem_budget_bytes()
    single = (Npad <= _SINGLE_PASS_MAX_NPAD) and not force_tiled

    if single:
        tb = 128 if B <= 256 else 256          # keep >=2 batch tiles for v7x megacore
        Bpad = _round_up(B, tb)
        x_pad = jnp.zeros((Bpad, Npad), jnp.bfloat16).at[:B, :node_num].set(
            x.astype(jnp.bfloat16))
        out = _single_pass_call(x_pad, w1, w2, b2, tb=tb, out_dtype=out_dtype,
                                vmem_limit=budget)
    else:
        hidden = w1.shape[1]
        tn = tile_n if tile_n is not None else min(512, Npad)
        while Npad % tn:
            tn -= 128
        tb = 256
        if B <= 256 or _tiled_vmem_bytes(256, tn, Npad, hidden) > budget:
            tb = 128
        # TODO(synk): if node_num is so large that the (tb, Npad) logits slab does not
        # fit even at tb=128, fall back to a recompute-logits phase 2 (second w2 stream).
        Bpad = _round_up(B, tb)
        x_pad = jnp.zeros((Bpad, Npad), jnp.bfloat16).at[:B, :node_num].set(
            x.astype(jnp.bfloat16))
        out = _tiled_call(x_pad, w1, w2, b2, tb=tb, tn=tn, out_dtype=out_dtype,
                          vmem_limit=budget)
    return out[:B, :node_num]


def reference_forward(x, w_in, w_out, b_out):
    # precision-matched reference: bf16 MXU operands, f32 accumulation + softmax
    xb = x.astype(jnp.bfloat16)
    h = jnp.dot(xb, w_in.T.astype(jnp.bfloat16), preferred_element_type=jnp.float32)
    logits = jnp.dot(h.astype(jnp.bfloat16), w_out.T.astype(jnp.bfloat16),
                     preferred_element_type=jnp.float32) + b_out[None, :]
    return jax.nn.log_softmax(logits, axis=-1)


if __name__ == "__main__":
    node_num = 300     # padded to 384 (3 node tiles of 128 in the forced-tiled test)
    hidden_dim = 32
    batch = 200        # padded to 256 (2 batch tiles -> both v7x TensorCores busy)

    key = jax.random.PRNGKey(0)
    k_x, k_w1, k_w2, k_b2 = jax.random.split(key, 4)

    # nn.Linear-style U(-1/sqrt(fan_in), 1/sqrt(fan_in)) init
    bound1 = 1.0 / (node_num ** 0.5)
    bound2 = 1.0 / (hidden_dim ** 0.5)
    w_in = jax.random.uniform(k_w1, (hidden_dim, node_num), jnp.float32, -bound1, bound1)
    w_out = jax.random.uniform(k_w2, (node_num, hidden_dim), jnp.float32, -bound2, bound2)
    b_out = jax.random.uniform(k_b2, (node_num,), jnp.float32, -bound2, bound2)
    x = jax.random.normal(k_x, (batch, node_num), jnp.float32)

    w1, w2, b2 = prepare_params(w_in, w_out, b_out)
    ref = reference_forward(x, w_in, w_out, b_out)

    # Fast path for small node_num: single-pass fused kernel.
    out = jax.block_until_ready(deepwalk_forward(x, w1, w2, b2))
    assert out.shape == (batch, node_num)
    diff = float(jnp.max(jnp.abs(out - ref)))
    assert jnp.allclose(out, ref, atol=2e-3, rtol=2e-3), f"single-pass mismatch: {diff}"

    # Also exercise the tiled (large node_num) path on the same data: 3 node tiles.
    out_t = jax.block_until_ready(
        deepwalk_forward(x, w1, w2, b2, force_tiled=True, tile_n=128))
    diff_t = float(jnp.max(jnp.abs(out_t - ref)))
    assert jnp.allclose(out_t, ref, atol=2e-3, rtol=2e-3), f"tiled mismatch: {diff_t}"

    print("KERNEL_OK")
</pallas_src>

<mosaic_0001>
module attributes {stable_mosaic.version = 11 : i64} {
  func.func @deepwalk_single_pass_kernel(%arg0: i32, %arg1: memref<128x384xbf16, #tpu.memory_space<vmem>>, %arg2: memref<384x32xbf16, #tpu.memory_space<vmem>>, %arg3: memref<32x384xbf16, #tpu.memory_space<vmem>>, %arg4: memref<1x384xf32, #tpu.memory_space<vmem>>, %arg5: memref<128x384xf32, #tpu.memory_space<vmem>>) attributes {dimension_semantics = [#tpu.dimension_semantics<parallel>], iteration_bounds = array<i64: 2>, scalar_prefetch = 0 : i64, scratch_operands = 0 : i64, tpu.core_type = #tpu.core_type<tc>, window_params = [{transform_indices = @transform_0, window_bounds = array<i64: 128, 384>}, {pipeline_mode = #tpu.pipeline_mode<synchronous>, transform_indices = @transform_1, window_bounds = array<i64: 384, 32>}, {pipeline_mode = #tpu.pipeline_mode<synchronous>, transform_indices = @transform_2, window_bounds = array<i64: 32, 384>}, {pipeline_mode = #tpu.pipeline_mode<synchronous>, transform_indices = @transform_3, window_bounds = array<i64: 1, 384>}, {transform_indices = @transform_4, window_bounds = array<i64: 128, 384>}]} {
    %c0 = arith.constant 0 : index
    %c0_0 = arith.constant 0 : index
    %0 = vector.load %arg1[%c0, %c0_0] : memref<128x384xbf16, #tpu.memory_space<vmem>>, vector<128x384xbf16>
    %c0_1 = arith.constant 0 : index
    %c0_2 = arith.constant 0 : index
    %1 = vector.load %arg2[%c0_1, %c0_2] : memref<384x32xbf16, #tpu.memory_space<vmem>>, vector<384x32xbf16>
    %cst = arith.constant dense<0.000000e+00> : vector<128x32xf32>
    %2 = tpu.matmul %0, %1, %cst {dimension_numbers = #tpu.dot_dimension_numbers<[1], [0], [0], [1], [0, 0, 1, 1], [], []>} : vector<128x384xbf16>, vector<384x32xbf16>, vector<128x32xf32> -> vector<128x32xf32>
    %3 = arith.truncf %2 : vector<128x32xf32> to vector<128x32xbf16>
    %c0_3 = arith.constant 0 : index
    %c0_4 = arith.constant 0 : index
    %4 = vector.load %arg3[%c0_3, %c0_4] : memref<32x384xbf16, #tpu.memory_space<vmem>>, vector<32x384xbf16>
    %cst_5 = arith.constant dense<0.000000e+00> : vector<128x384xf32>
    %5 = tpu.matmul %3, %4, %cst_5 {dimension_numbers = #tpu.dot_dimension_numbers<[1], [0], [0], [1], [0, 0, 1, 1], [], []>} : vector<128x32xbf16>, vector<32x384xbf16>, vector<128x384xf32> -> vector<128x384xf32>
    %c0_6 = arith.constant 0 : index
    %c0_7 = arith.constant 0 : index
    %6 = vector.load %arg4[%c0_6, %c0_7] : memref<1x384xf32, #tpu.memory_space<vmem>>, vector<1x384xf32>
    %7 = vector.broadcast %6 : vector<1x384xf32> to vector<128x384xf32>
    %8 = arith.addf %5, %7 : vector<128x384xf32>
    %cst_8 = arith.constant dense<0xFF800000> : vector<128xf32>
    %9 = vector.multi_reduction <maximumf>, %8, %cst_8 [1] : vector<128x384xf32> to vector<128xf32>
    %10 = vector.shape_cast %9 : vector<128xf32> to vector<128x1xf32>
    %11 = vector.broadcast %10 : vector<128x1xf32> to vector<128x384xf32>
    %12 = arith.subf %8, %11 : vector<128x384xf32>
    %13 = math.exp %12 : vector<128x384xf32>
    %cst_9 = arith.constant dense<0.000000e+00> : vector<128xf32>
    %14 = vector.multi_reduction <add>, %13, %cst_9 [1] : vector<128x384xf32> to vector<128xf32>
    %15 = vector.shape_cast %14 : vector<128xf32> to vector<128x1xf32>
    %16 = math.log %15 : vector<128x1xf32>
    %17 = arith.addf %10, %16 : vector<128x1xf32>
    %18 = vector.broadcast %17 : vector<128x1xf32> to vector<128x384xf32>
    %19 = arith.subf %8, %18 : vector<128x384xf32>
    %c0_10 = arith.constant 0 : index
    %c0_11 = arith.constant 0 : index
    %20 = vector.load %arg5[%c0_10, %c0_11] : memref<128x384xf32, #tpu.memory_space<vmem>>, vector<128x384xf32>
    tpu.vector_store %arg5[%c0_10, %c0_11], %19 {strides = array<i32>} : memref<128x384xf32, #tpu.memory_space<vmem>>, vector<128x384xf32>,
    return
  }
  func.func @transform_0(%arg0: i32) -> (i32, i32) {
    %c0_i32 = arith.constant 0 : i32
    %c0_i32_0 = arith.constant 0 : i32
    return %arg0, %c0_i32 : i32, i32
  }
  func.func @transform_1(%arg0: i32) -> (i32, i32) {
    %c0_i32 = arith.constant 0 : i32
    %c0_i32_0 = arith.constant 0 : i32
    %c0_i32_1 = arith.constant 0 : i32
    return %c0_i32, %c0_i32_0 : i32, i32
  }
  func.func @transform_2(%arg0: i32) -> (i32, i32) {
    %c0_i32 = arith.constant 0 : i32
    %c0_i32_0 = arith.constant 0 : i32
    %c0_i32_1 = arith.constant 0 : i32
    return %c0_i32, %c0_i32_0 : i32, i32
  }
  func.func @transform_3(%arg0: i32) -> (i32, i32) {
    %c0_i32 = arith.constant 0 : i32
    %c0_i32_0 = arith.constant 0 : i32
    %c0_i32_1 = arith.constant 0 : i32
    return %c0_i32, %c0_i32_0 : i32, i32
  }
  func.func @transform_4(%arg0: i32) -> (i32, i32) {
    %c0_i32 = arith.constant 0 : i32
    %c0_i32_0 = arith.constant 0 : i32
    return %arg0, %c0_i32 : i32, i32
  }
}

</mosaic_0001>

<llo_original>
// kernel: deepwalk_forward.1
$region0: #{deepwalk_forward.1}
  #allocation0 [shape = 'u32[]', space=smem, size = 0x4, offset = 0x4, fixed_abs, tag = 'smem constant byte address 0x4 - core index']
  #allocation1 [shape = 'u32[144,128]{1,0:T(1,128)}', space=vmem, size = 0x12000, scoped, tag = 'internal scratch']
  %s0 = inlined_call_operand.vmem [shape: bf16[256,384], index: 0, kind: input, shape index: {}]
  %s1 = inlined_call_operand.vmem [shape: bf16[384,32], index: 1, kind: input, shape index: {}]
  %s2 = inlined_call_operand.vmem [shape: bf16[32,384], index: 2, kind: input, shape index: {}]
  %s3 = inlined_call_operand.vmem [shape: f32[1,384], index: 3, kind: input, shape index: {}]
  %s4 = inlined_call_operand.vmem [shape: f32[256,384], index: 4, kind: output, shape index: {}]
  %s5 = sld [smem:[#allocation0]]
  $region49: #{deepwalk_forward.1} parent=0
    _
  %s7 = ssub.s32 1, %s5
  %s8 = scalar_select 0, %s7, %s5
  loop: start=0, step=1, limit=4
  $region2: #{deepwalk_forward.1} parent=0 // loop_pre_header
    _
  $region3: #{deepwalk_forward.1} parent=0 // loop_header
    %s10 = sphi 0, %s14
    %p11 = scmp.ge.s32.totalorder %s10, 4
    %s20 = sphi 0, %s22
    %s23 = sphi 0, %s20
    %s24 = sphi 0, %s23
    %s40 = sphi 0, %s24
    %s44 = sphi 0, %s44
    %s46 = sphi 0, %s44
    %s47 = sphi 0, %s46
    %s61 = sphi 0, %s47
    %s65 = sphi 0, %s65
    %s67 = sphi 0, %s65
    %s68 = sphi 0, %s67
    %s82 = sphi 0, %s68
    %s86 = sphi 0, %s86
    %s88 = sphi 0, %s86
    %s89 = sphi 0, %s88
    %s103 = sphi 0, %s89
    %s109 = sphi 0, %s111
    %s112 = sphi 0, %s109
    %s113 = sphi 0, %s112
    %s129 = sphi 0, %s113
  $region4: #{deepwalk_forward.1} parent=0 // loop_header_branch
    %13 = sbr.rel (%p11) target = $region8
  $region5: #{deepwalk_forward.1} parent=0 // loop_body
    %s15 = ssub.s32 %s10, 1
    %s16 = ssub.s32 %s10, 2
    %s17 = sadd.s32 %s10, 1
    %s18 = ssub.s32 %s10, %s17
    %p19 = scmp.eq.s32.totalorder %s18, 0
    %s21 = sadd.s32 %s20, 1
    %s22 = scalar_select %p19, %s20, %s21
    %p25 = pneg %p19
    %p26 = scmp.eq.s32.totalorder %s10, 1
    %p27 = por %p25, %p26
    %p28 = scmp.ne.s32.totalorder %s20, %s23
    %p29 = scmp.eq.s32.totalorder %s10, 0
    %p30 = por %p28, %p29
    %p31 = scmp.ne.s32.totalorder %s20, %s23
    %p32 = scmp.eq.s32.totalorder %s15, 1
    %p33 = por %p31, %p32
    %p34 = scmp.ne.s32.totalorder %s23, %s24
    %p35 = scmp.eq.s32.totalorder %s15, 0
    %p36 = por %p34, %p35
    %p37 = scmp.ne.s32.totalorder %s23, %s24
    %p38 = scmp.eq.s32.totalorder %s16, 1
    %p39 = por %p37, %p38
    %p41 = scmp.ne.s32.totalorder %s24, %s40
    %p42 = scmp.eq.s32.totalorder %s16, 0
    %p43 = por %p41, %p42
    %s45 = sadd.s32 %s44, 1
    %p48 = scmp.eq.s32.totalorder %s10, 1
    %p49 = scmp.ne.s32.totalorder %s44, %s46
    %p50 = scmp.eq.s32.totalorder %s10, 0
    %p51 = por %p49, %p50
    %p52 = scmp.ne.s32.totalorder %s44, %s46
    %p53 = scmp.eq.s32.totalorder %s15, 1
    %p54 = por %p52, %p53
    %p55 = scmp.ne.s32.totalorder %s46, %s47
    %p56 = scmp.eq.s32.totalorder %s15, 0
    %p57 = por %p55, %p56
    %p58 = scmp.ne.s32.totalorder %s46, %s47
    %p59 = scmp.eq.s32.totalorder %s16, 1
    %p60 = por %p58, %p59
    %p62 = scmp.ne.s32.totalorder %s47, %s61
    %p63 = scmp.eq.s32.totalorder %s16, 0
    %p64 = por %p62, %p63
    %s66 = sadd.s32 %s65, 1
    %p69 = scmp.eq.s32.totalorder %s10, 1
    %p70 = scmp.ne.s32.totalorder %s65, %s67
    %p71 = scmp.eq.s32.totalorder %s10, 0
    %p72 = por %p70, %p71
    %p73 = scmp.ne.s32.totalorder %s65, %s67
    %p74 = scmp.eq.s32.totalorder %s15, 1
    %p75 = por %p73, %p74
    %p76 = scmp.ne.s32.totalorder %s67, %s68
    %p77 = scmp.eq.s32.totalorder %s15, 0
    %p78 = por %p76, %p77
    %p79 = scmp.ne.s32.totalorder %s67, %s68
    %p80 = scmp.eq.s32.totalorder %s16, 1
    %p81 = por %p79, %p80
    %p83 = scmp.ne.s32.totalorder %s68, %s82
    %p84 = scmp.eq.s32.totalorder %s16, 0
    %p85 = por %p83, %p84
    %s87 = sadd.s32 %s86, 1
    %p90 = scmp.eq.s32.totalorder %s10, 1
    %p91 = scmp.ne.s32.totalorder %s86, %s88
    %p92 = scmp.eq.s32.totalorder %s10, 0
    %p93 = por %p91, %p92
    %p94 = scmp.ne.s32.totalorder %s86, %s88
    %p95 = scmp.eq.s32.totalorder %s15, 1
    %p96 = por %p94, %p95
    %p97 = scmp.ne.s32.totalorder %s88, %s89
    %p98 = scmp.eq.s32.totalorder %s15, 0
    %p99 = por %p97, %p98
    %p100 = scmp.ne.s32.totalorder %s88, %s89
    %p101 = scmp.eq.s32.totalorder %s16, 1
    %p102 = por %p100, %p101
    %p104 = scmp.ne.s32.totalorder %s89, %s103
    %p105 = scmp.eq.s32.totalorder %s16, 0
    %p106 = por %p104, %p105
    %s107 = ssub.s32 %s10, %s17
    %p108 = scmp.eq.s32.totalorder %s107, 0
    %s110 = sadd.s32 %s109, 1
    %s111 = scalar_select %p108, %s109, %s110
    %p114 = pneg %p108
    %p115 = scmp.eq.s32.totalorder %s10, 1
    %p116 = por %p114, %p115
    %p117 = scmp.ne.s32.totalorder %s109, %s112
    %p118 = scmp.eq.s32.totalorder %s10, 0
    %p119 = por %p117, %p118
    %p120 = scmp.ne.s32.totalorder %s109, %s112
    %p121 = scmp.eq.s32.totalorder %s15, 1
    %p122 = por %p120, %p121
    %p123 = scmp.ne.s32.totalorder %s112, %s113
    %p124 = scmp.eq.s32.totalorder %s15, 0
    %p125 = por %p123, %p124
    %p126 = scmp.ne.s32.totalorder %s112, %s113
    %p127 = scmp.eq.s32.totalorder %s16, 1
    %p128 = por %p126, %p127
    %p130 = scmp.ne.s32.totalorder %s113, %s129
    %p131 = scmp.eq.s32.totalorder %s16, 0
    %p132 = por %p130, %p131
    %p133 = scmp.le.s32.totalorder 1, %s10
    %p134 = scmp.lt.s32.totalorder %s10, 3
    %p135 = pnand %p133, %p134
    %p136 = pneg %p135
    // Predicated region
    $region9: #{deepwalk_forward.1} parent=5 // pred_check
      _
    $region10: #{deepwalk_forward.1} parent=5 // pred_check_branch
      %138 = sbr.rel (%p135) target = $region12
    $region11: #{deepwalk_forward.1} parent=5 // pred_region
      %s139 = ssub.s32 %s10, 1
      // Predicated region
      $region13: #{deepwalk_forward.1} parent=11 // pred_check
        %p140 = pneg %p57
      $region14: #{deepwalk_forward.1} parent=11 // pred_check_branch
        %142 = sbr.rel (%p140) target = $region16
      $region15: #{deepwalk_forward.1} parent=11 // pred_region
        _
      $region16: #{deepwalk_forward.1} parent=11 // pred_fallthru
        _
      // Predicated region
      $region17: #{deepwalk_forward.1} parent=11 // pred_check
        %p143 = pneg %p78
      $region18: #{deepwalk_forward.1} parent=11 // pred_check_branch
        %145 = sbr.rel (%p143) target = $region20
      $region19: #{deepwalk_forward.1} parent=11 // pred_region
        _
      $region20: #{deepwalk_forward.1} parent=11 // pred_fallthru
        _
      // Predicated region
      $region21: #{deepwalk_forward.1} parent=11 // pred_check
        %p146 = pneg %p99
      $region22: #{deepwalk_forward.1} parent=11 // pred_check_branch
        %148 = sbr.rel (%p146) target = $region24
      $region23: #{deepwalk_forward.1} parent=11 // pred_region
        _
      $region24: #{deepwalk_forward.1} parent=11 // pred_fallthru
        _
    $region12: #{deepwalk_forward.1} parent=5 // pred_fallthru
      _
    %p149 = scmp.lt.s32.totalorder %s10, 2
    // Predicated region
    $region25: #{deepwalk_forward.1} parent=5 // pred_check
      %p150 = pneg %p149
    $region26: #{deepwalk_forward.1} parent=5 // pred_check_branch
      %152 = sbr.rel (%p150) target = $region28
    $region27: #{deepwalk_forward.1} parent=5 // pred_region
      // Predicated region
      $region29: #{deepwalk_forward.1} parent=27 // pred_check
        %p153 = pneg %p30
      $region30: #{deepwalk_forward.1} parent=27 // pred_check_branch
        %155 = sbr.rel (%p153) target = $region32
      $region31: #{deepwalk_forward.1} parent=27 // pred_region
        %s156 = smul.u32 16, %s10
        %p157 = scmp.lt.s32.totalorder %s156, 31
        %s158 = scalar_select %p157, %s156, 31
        %s159 = smul.addr %s158, 3
        %s160 = smul.addr %s159, 4
        %s161 = scalar_lea.vmem %s0, %s160
        %s162 = smul.u32 16, %s10
      $region32: #{deepwalk_forward.1} parent=27 // pred_fallthru
        _
    $region28: #{deepwalk_forward.1} parent=5 // pred_fallthru
      _
    %p163 = scmp.le.s32.totalorder 1, %s10
    %p164 = scmp.lt.s32.totalorder %s10, 3
    %p165 = pnand %p163, %p164
    %p166 = pneg %p165
    // Predicated region
    $region33: #{deepwalk_forward.1} parent=5 // pred_check
      _
    $region34: #{deepwalk_forward.1} parent=5 // pred_check_branch
      %168 = sbr.rel (%p165) target = $region36
    $region35: #{deepwalk_forward.1} parent=5 // pred_region
      %s169 = ssub.s32 %s10, 1
      %s170 = smul.u32 16, %s15
      %p171 = scmp.lt.s32.totalorder %s170, 31
      %s172 = scalar_select %p171, %s170, 31
      %s173 = smul.addr %s172, 3
      %s174 = smul.addr %s173, 4
      %s175 = scalar_lea.vmem %s0, %s174
      %p176 = pneg %p36
      %p177 = pneg %p33
      %p178 = pneg %p57
      %p179 = pneg %p54
      %p180 = pneg %p78
      %p181 = pneg %p75
      %p182 = pneg %p99
      %p183 = pneg %p96
      %p184 = pneg %p125
      %p185 = pneg %p122
      %s186 = smul.u32 16, %s15
      %p187 = scmp.lt.s32.totalorder %s186, 31
      %s188 = scalar_select %p187, %s186, 31
      %s189 = smul.addr %s188, 3
      %s190 = smul.addr %s189, 8
      %s191 = scalar_lea.vmem %s4, %s190
      %s192 = smul.u32 16, %s15
      %p193 = scmp.lt.s32.totalorder %s192, 31
      %s194 = scalar_select %p193, %s192, 31
      %s195 = smul.addr %s194, 3
      %s196 = smul.addr %s195, 4
      %s197 = scalar_lea.vmem %s0, %s196
      %s198 = smul.u32 16, %s15
      %s199 = smul.u32 16, %s15
      %p200 = scmp.lt.s32.totalorder %s199, 31
      %s201 = scalar_select %p200, %s199, 31
      %s202 = smul.addr %s201, 3
      %s203 = smul.addr %s202, 8
      %s204 = scalar_lea.vmem %s4, %s203
      %s205 = smul.u32 16, %s15
      %v207 = vld [vmem:[%s197] sm:$0xff]
      %v208 = vld [vmem:[%s197 + $0x8] sm:$0xf]
      %v209 = vld [vmem:[%s197 + $0xc] sm:$0xff]
      %v210 = vld [vmem:[%s197 + $0x14] sm:$0xf]
      %v211 = vld [vmem:[%s197 + $0x18] sm:$0xff]
      %v212 = vld [vmem:[%s197 + $0x20] sm:$0xf]
      %v213 = vld [vmem:[%s197 + $0x24] sm:$0xff]
      %v214 = vld [vmem:[%s197 + $0x2c] sm:$0xf]
      %v215 = vld [vmem:[%s197 + $0x30] sm:$0xff]
      %v216 = vld [vmem:[%s197 + $0x38] sm:$0xf]
      %v217 = vld [vmem:[%s197 + $0x3c] sm:$0xff]
      %v218 = vld [vmem:[%s197 + $0x44] sm:$0xf]
      %v219 = vld [vmem:[%s197 + $0x48] sm:$0xff]
      %v220 = vld [vmem:[%s197 + $0x50] sm:$0xf]
      %v221 = vld [vmem:[%s197 + $0x54] sm:$0xff]
      %v222 = vld [vmem:[%s197 + $0x5c] sm:$0xf]
      %v223 = vld [vmem:[%s197 + $0x60] sm:$0xff]
      %v224 = vld [vmem:[%s197 + $0x68] sm:$0xf]
      %v225 = vld [vmem:[%s197 + $0x6c] sm:$0xff]
      %v226 = vld [vmem:[%s197 + $0x74] sm:$0xf]
      %v227 = vld [vmem:[%s197 + $0x78] sm:$0xff]
      %v228 = vld [vmem:[%s197 + $0x80] sm:$0xf]
      %v229 = vld [vmem:[%s197 + $0x84] sm:$0xff]
      %v230 = vld [vmem:[%s197 + $0x8c] sm:$0xf]
      %v231 = vld [vmem:[%s197 + $0x90] sm:$0xff]
      %v232 = vld [vmem:[%s197 + $0x98] sm:$0xf]
      %v233 = vld [vmem:[%s197 + $0x9c] sm:$0xff]
      %v234 = vld [vmem:[%s197 + $0xa4] sm:$0xf]
      %v235 = vld [vmem:[%s197 + $0xa8] sm:$0xff]
      %v236 = vld [vmem:[%s197 + $0xb0] sm:$0xf]
      %v237 = vld [vmem:[%s197 + $0xb4] sm:$0xff]
      %v238 = vld [vmem:[%s197 + $0xbc] sm:$0xf]
      %v239 = vld [vmem:[%s1] sm:$0xf]
      %v240 = vld [vmem:[%s1 + $0x4] sm:$0xf]
      %v241 = vld [vmem:[%s1 + $0x8] sm:$0xf]
      %v242 = vld [vmem:[%s1 + $0xc] sm:$0xf]
      %v243 = vld [vmem:[%s1 + $0x10] sm:$0xf]
      %v244 = vld [vmem:[%s1 + $0x14] sm:$0xf]
      %v245 = vld [vmem:[%s1 + $0x18] sm:$0xf]
      %v246 = vld [vmem:[%s1 + $0x1c] sm:$0xf]
      %v247 = vld [vmem:[%s1 + $0x20] sm:$0xf]
      %v248 = vld [vmem:[%s1 + $0x24] sm:$0xf]
      %v249 = vld [vmem:[%s1 + $0x28] sm:$0xf]
      %v250 = vld [vmem:[%s1 + $0x2c] sm:$0xf]
      %v251 = vld [vmem:[%s1 + $0x30] sm:$0xf]
      %v252 = vld [vmem:[%s1 + $0x34] sm:$0xf]
      %v253 = vld [vmem:[%s1 + $0x38] sm:$0xf]
      %v254 = vld [vmem:[%s1 + $0x3c] sm:$0xf]
      %v255 = vld [vmem:[%s1 + $0x40] sm:$0xf]
      %v256 = vld [vmem:[%s1 + $0x44] sm:$0xf]
      %v257 = vld [vmem:[%s1 + $0x48] sm:$0xf]
      %v258 = vld [vmem:[%s1 + $0x4c] sm:$0xf]
      %v259 = vld [vmem:[%s1 + $0x50] sm:$0xf]
      %v260 = vld [vmem:[%s1 + $0x54] sm:$0xf]
      %v261 = vld [vmem:[%s1 + $0x58] sm:$0xf]
      %v262 = vld [vmem:[%s1 + $0x5c] sm:$0xf]
      %v263 = vld [vmem:[%s1 + $0x60] sm:$0xf]
      %v264 = vld [vmem:[%s1 + $0x64] sm:$0xf]
      %v265 = vld [vmem:[%s1 + $0x68] sm:$0xf]
      %v266 = vld [vmem:[%s1 + $0x6c] sm:$0xf]
      %v267 = vld [vmem:[%s1 + $0x70] sm:$0xf]
      %v268 = vld [vmem:[%s1 + $0x74] sm:$0xf]
      %v269 = vld [vmem:[%s1 + $0x78] sm:$0xf]
      %v270 = vld [vmem:[%s1 + $0x7c] sm:$0xf]
      %v271 = vld [vmem:[%s1 + $0x80] sm:$0xf]
      %v272 = vld [vmem:[%s1 + $0x84] sm:$0xf]
      %v273 = vld [vmem:[%s1 + $0x88] sm:$0xf]
      %v274 = vld [vmem:[%s1 + $0x8c] sm:$0xf]
      %v275 = vld [vmem:[%s1 + $0x90] sm:$0xf]
      %v276 = vld [vmem:[%s1 + $0x94] sm:$0xf]
      %v277 = vld [vmem:[%s1 + $0x98] sm:$0xf]
      %v278 = vld [vmem:[%s1 + $0x9c] sm:$0xf]
      %v279 = vld [vmem:[%s1 + $0xa0] sm:$0xf]
      %v280 = vld [vmem:[%s1 + $0xa4] sm:$0xf]
      %v281 = vld [vmem:[%s1 + $0xa8] sm:$0xf]
      %v282 = vld [vmem:[%s1 + $0xac] sm:$0xf]
      %v283 = vld [vmem:[%s1 + $0xb0] sm:$0xf]
      %v284 = vld [vmem:[%s1 + $0xb4] sm:$0xf]
      %v285 = vld [vmem:[%s1 + $0xb8] sm:$0xf]
      %v286 = vld [vmem:[%s1 + $0xbc] sm:$0xf]
      %v319 = vunpack.c.l.b16 %v207
      %v320 = vunpack.c.h.b16 %v207
      %v321 = vunpack.c.l.b16 %v208
      %v322 = vunpack.c.l.b16 %v209
      %v323 = vunpack.c.h.b16 %v209
      %v324 = vunpack.c.l.b16 %v210
      %v325 = vunpack.c.l.b16 %v211
      %v326 = vunpack.c.h.b16 %v211
      %v327 = vunpack.c.l.b16 %v212
      %v328 = vunpack.c.l.b16 %v213
      %v329 = vunpack.c.h.b16 %v213
      %v330 = vunpack.c.l.b16 %v214
      %v331 = vunpack.c.l.b16 %v215
      %v332 = vunpack.c.h.b16 %v215
      %v333 = vunpack.c.l.b16 %v216
      %v334 = vunpack.c.l.b16 %v217
      %v335 = vunpack.c.h.b16 %v217
      %v336 = vunpack.c.l.b16 %v218
      %v337 = vunpack.c.l.b16 %v219
      %v338 = vunpack.c.h.b16 %v219
      %v339 = vunpack.c.l.b16 %v220
      %v340 = vunpack.c.l.b16 %v221
      %v341 = vunpack.c.h.b16 %v221
      %v342 = vunpack.c.l.b16 %v222
      %v343 = vunpack.c.l.b16 %v223
      %v344 = vunpack.c.h.b16 %v223
      %v345 = vunpack.c.l.b16 %v224
      %v346 = vunpack.c.l.b16 %v225
      %v347 = vunpack.c.h.b16 %v225
      %v348 = vunpack.c.l.b16 %v226
      %v349 = vunpack.c.l.b16 %v227
      %v350 = vunpack.c.h.b16 %v227
      %v351 = vunpack.c.l.b16 %v228
      %v352 = vunpack.c.l.b16 %v229
      %v353 = vunpack.c.h.b16 %v229
      %v354 = vunpack.c.l.b16 %v230
      %v355 = vunpack.c.l.b16 %v231
      %v356 = vunpack.c.h.b16 %v231
      %v357 = vunpack.c.l.b16 %v232
      %v358 = vunpack.c.l.b16 %v233
      %v359 = vunpack.c.h.b16 %v233
      %v360 = vunpack.c.l.b16 %v234
      %v361 = vunpack.c.l.b16 %v235
      %v362 = vunpack.c.h.b16 %v235
      %v363 = vunpack.c.l.b16 %v236
      %v364 = vunpack.c.l.b16 %v237
      %v365 = vunpack.c.h.b16 %v237
      %v366 = vunpack.c.l.b16 %v238
      %v367 = vpack.c.b16 %v322, %v319
      %v368 = vpack.c.b16 %v323, %v320
      %v369 = vpack.c.b16 %v324, %v321
      %v370 = vpack.c.b16 %v328, %v325
      %v371 = vpack.c.b16 %v329, %v326
      %v372 = vpack.c.b16 %v330, %v327
      %v373 = vpack.c.b16 %v334, %v331
      %v374 = vpack.c.b16 %v335, %v332
      %v375 = vpack.c.b16 %v336, %v333
      %v376 = vpack.c.b16 %v340, %v337
      %v377 = vpack.c.b16 %v341, %v338
      %v378 = vpack.c.b16 %v342, %v339
      %v379 = vpack.c.b16 %v346, %v343
      %v380 = vpack.c.b16 %v347, %v344
      %v381 = vpack.c.b16 %v348, %v345
      %v382 = vpack.c.b16 %v352, %v349
      %v383 = vpack.c.b16 %v353, %v350
      %v384 = vpack.c.b16 %v354, %v351
      %v385 = vpack.c.b16 %v358, %v355
      %v386 = vpack.c.b16 %v359, %v356
      %v387 = vpack.c.b16 %v360, %v357
      %v388 = vpack.c.b16 %v364, %v361
      %v389 = vpack.c.b16 %v365, %v362
      %v390 = vpack.c.b16 %v366, %v363
      %v463 = vunpack.c.l.b16 %v239
      %v464 = vunpack.c.l.b16 %v240
      %v465 = vunpack.c.l.b16 %v241
      %v466 = vunpack.c.l.b16 %v242
      %v467 = vunpack.c.l.b16 %v243
      %v468 = vunpack.c.l.b16 %v244
      %v469 = vunpack.c.l.b16 %v245
      %v470 = vunpack.c.l.b16 %v246
      %v471 = vunpack.c.l.b16 %v247
      %v472 = vunpack.c.l.b16 %v248
      %v473 = vunpack.c.l.b16 %v249
      %v474 = vunpack.c.l.b16 %v250
      %v475 = vunpack.c.l.b16 %v251
      %v476 = vunpack.c.l.b16 %v252
      %v477 = vunpack.c.l.b16 %v253
      %v478 = vunpack.c.l.b16 %v254
      %v479 = vunpack.c.l.b16 %v255
      %v480 = vunpack.c.l.b16 %v256
      %v481 = vunpack.c.l.b16 %v257
      %v482 = vunpack.c.l.b16 %v258
      %v483 = vunpack.c.l.b16 %v259
      %v484 = vunpack.c.l.b16 %v260
      %v485 = vunpack.c.l.b16 %v261
      %v486 = vunpack.c.l.b16 %v262
      %v487 = vunpack.c.l.b16 %v263
      %v488 = vunpack.c.l.b16 %v264
      %v489 = vunpack.c.l.b16 %v265
      %v490 = vunpack.c.l.b16 %v266
      %v491 = vunpack.c.l.b16 %v267
      %v492 = vunpack.c.l.b16 %v268
      %v493 = vunpack.c.l.b16 %v269
      %v494 = vunpack.c.l.b16 %v270
      %v495 = vunpack.c.l.b16 %v271
      %v496 = vunpack.c.l.b16 %v272
      %v497 = vunpack.c.l.b16 %v273
      %v498 = vunpack.c.l.b16 %v274
      %v499 = vunpack.c.l.b16 %v275
      %v500 = vunpack.c.l.b16 %v276
      %v501 = vunpack.c.l.b16 %v277
      %v502 = vunpack.c.l.b16 %v278
      %v503 = vunpack.c.l.b16 %v279
      %v504 = vunpack.c.l.b16 %v280
      %v505 = vunpack.c.l.b16 %v281
      %v506 = vunpack.c.l.b16 %v282
      %v507 = vunpack.c.l.b16 %v283
      %v508 = vunpack.c.l.b16 %v284
      %v509 = vunpack.c.l.b16 %v285
      %v510 = vunpack.c.l.b16 %v286
      %v511 = vpack.c.b16 %v464, %v463
      %v512 = vpack.c.b16 %v466, %v465
      %v513 = vpack.c.b16 %v468, %v467
      %v514 = vpack.c.b16 %v470, %v469
      %v515 = vpack.c.b16 %v472, %v471
      %v516 = vpack.c.b16 %v474, %v473
      %v517 = vpack.c.b16 %v476, %v475
      %v518 = vpack.c.b16 %v478, %v477
      %v519 = vpack.c.b16 %v480, %v479
      %v520 = vpack.c.b16 %v482, %v481
      %v521 = vpack.c.b16 %v484, %v483
      %v522 = vpack.c.b16 %v486, %v485
      %v523 = vpack.c.b16 %v488, %v487
      %v524 = vpack.c.b16 %v490, %v489
      %v525 = vpack.c.b16 %v492, %v491
      %v526 = vpack.c.b16 %v494, %v493
      %v527 = vpack.c.b16 %v496, %v495
      %v528 = vpack.c.b16 %v498, %v497
      %v529 = vpack.c.b16 %v500, %v499
      %v530 = vpack.c.b16 %v502, %v501
      %v531 = vpack.c.b16 %v504, %v503
      %v532 = vpack.c.b16 %v506, %v505
      %v533 = vpack.c.b16 %v508, %v507
      %v534 = vpack.c.b16 %v510, %v509
      %559 = vmatprep.subr.bf16.mxu0 0
      %560 = vmatpush1.bf16.msra.mxu0 %v511
      %561 = vmatprep.subr.bf16.mxu0 0
      %562 = vmatpush1.bf16.msra.mxu0 %v512
      %563 = vmatprep.subr.bf16.mxu0 0
      %564 = vmatpush1.bf16.msra.mxu0 %v513
      %565 = vmatprep.subr.bf16.mxu0 0
      %566 = vmatpush1.bf16.msra.mxu0 %v514
      %567 = vmatprep.subr.bf16.mxu0 0
      %568 = vmatpush1.bf16.msra.mxu0 %v515
      %569 = vmatprep.subr.bf16.mxu0 0
      %570 = vmatpush1.bf16.msra.mxu0 %v516
      %571 = vmatprep.subr.bf16.mxu0 0
      %572 = vmatpush1.bf16.msra.mxu0 %v517
      %573 = vmatprep.subr.bf16.mxu0 0
      %574 = vmatpush1.bf16.msra.mxu0 %v518
      %575 = vmatprep.subr.bf16.mxu0 0
      %576 = vmatpush1.bf16.msra.mxu0 %v519
      %577 = vmatprep.subr.bf16.mxu0 0
      %578 = vmatpush1.bf16.msra.mxu0 %v520
      %579 = vmatprep.subr.bf16.mxu0 0
      %580 = vmatpush1.bf16.msra.mxu0 %v521
      %581 = vmatprep.subr.bf16.mxu0 0
      %582 = vmatpush1.bf16.msra.mxu0 %v522
      %583 = vmatprep.subr.bf16.mxu0 0
      %584 = vmatpush1.bf16.msra.mxu0 %v523
      %585 = vmatprep.subr.bf16.mxu0 0
      %586 = vmatpush1.bf16.msra.mxu0 %v524
      %587 = vmatprep.subr.bf16.mxu0 0
      %588 = vmatpush1.bf16.msra.mxu0 %v525
      %589 = vmatprep.subr.bf16.mxu0 0
      %590 = vmatpush1.bf16.msra.mxu0 %v526
      %591 = vmatprep.mubr.bf16.mxu0 %v368
      %592 = vmatmul.mubr.bf16.gmra.mrb[0].mxu0 %v367
      %v593 = vpop.f32.mrb[0].mxu0
      %v594 = vadd.f32 0.0, %v593
      %v595 = vpop.f32.mrb[0].mxu0
      %v596 = vpop.f32.mrb[0].mxu0
      %v597 = vadd.f32 0.0, %v596
      %v598 = vpop.f32.mrb[0].mxu0
      %599 = vmatprep.mubr.bf16.mxu0 %v371
      %600 = vmatmul.mubr.bf16.gmra.mrb[0].mxu0 %v370
      %v601 = vpop.f32.mrb[0].mxu0
      %v602 = vadd.f32 0.0, %v601
      %v603 = vpop.f32.mrb[0].mxu0
      %v604 = vpop.f32.mrb[0].mxu0
      %v605 = vadd.f32 0.0, %v604
      %v606 = vpop.f32.mrb[0].mxu0
      %607 = vmatprep.mubr.bf16.mxu0 %v374
      %608 = vmatmul.mubr.bf16.gmra.mrb[0].mxu0 %v373
      %v609 = vpop.f32.mrb[0].mxu0
      %v610 = vadd.f32 0.0, %v609
      %v611 = vpop.f32.mrb[0].mxu0
      %v612 = vpop.f32.mrb[0].mxu0
      %v613 = vadd.f32 0.0, %v612
      %v614 = vpop.f32.mrb[0].mxu0
      %615 = vmatprep.mubr.bf16.mxu0 %v377
      %616 = vmatmul.mubr.bf16.gmra.mrb[0].mxu0 %v376
      %v617 = vpop.f32.mrb[0].mxu0
      %v618 = vadd.f32 0.0, %v617
      %v619 = vpop.f32.mrb[0].mxu0
      %v620 = vpop.f32.mrb[0].mxu0
      %v621 = vadd.f32 0.0, %v620
      %v622 = vpop.f32.mrb[0].mxu0
      %623 = vmatprep.mubr.bf16.mxu0 %v380
      %624 = vmatmul.mubr.bf16.gmra.mrb[0].mxu0 %v379
      %v625 = vpop.f32.mrb[0].mxu0
      %v626 = vadd.f32 0.0, %v625
      %v627 = vpop.f32.mrb[0].mxu0
      %v628 = vpop.f32.mrb[0].mxu0
      %v629 = vadd.f32 0.0, %v628
      %v630 = vpop.f32.mrb[0].mxu0
      %631 = vmatprep.mubr.bf16.mxu0 %v383
      %632 = vmatmul.mubr.bf16.gmra.mrb[0].mxu0 %v382
      %v633 = vpop.f32.mrb[0].mxu0
      %v634 = vadd.f32 0.0, %v633
      %v635 = vpop.f32.mrb[0].mxu0
      %v636 = vpop.f32.mrb[0].mxu0
      %v637 = vadd.f32 0.0, %v636
      %v638 = vpop.f32.mrb[0].mxu0
      %639 = vmatprep.mubr.bf16.mxu0 %v386
      %640 = vmatmul.mubr.bf16.gmra.mrb[0].mxu0 %v385
      %v641 = vpop.f32.mrb[0].mxu0
      %v642 = vadd.f32 0.0, %v641
      %v643 = vpop.f32.mrb[0].mxu0
      %v644 = vpop.f32.mrb[0].mxu0
      %v645 = vadd.f32 0.0, %v644
      %v646 = vpop.f32.mrb[0].mxu0
      %647 = vmatprep.mubr.bf16.mxu0 %v389
      %648 = vmatmul.mubr.bf16.gmra.mrb[0].mxu0 %v388
      %v649 = vpop.f32.mrb[0].mxu0
      %v650 = vadd.f32 0.0, %v649
      %v651 = vpop.f32.mrb[0].mxu0
      %v652 = vpop.f32.mrb[0].mxu0
      %v653 = vadd.f32 0.0, %v652
      %v654 = vpop.f32.mrb[0].mxu0
      %655 = vdwg.mxu0
      %656 = vmatprep.subr.bf16.mxu0 0
      %657 = vmatpush1.bf16.msra.mxu0 %v527
      %658 = vmatprep.subr.bf16.mxu0 0
      %659 = vmatpush1.bf16.msra.mxu0 %v528
      %660 = vmatprep.subr.bf16.mxu0 0
      %661 = vmatpush1.bf16.msra.mxu0 %v529
      %662 = vmatprep.subr.bf16.mxu0 0
      %663 = vmatpush1.bf16.msra.mxu0 %v530
      %664 = vmatprep.subr.bf16.mxu0 0
      %665 = vmatpush1.bf16.msra.mxu0 %v531
      %666 = vmatprep.subr.bf16.mxu0 0
      %667 = vmatpush1.bf16.msra.mxu0 %v532
      %668 = vmatprep.subr.bf16.mxu0 0
      %669 = vmatpush1.bf16.msra.mxu0 %v533
      %670 = vmatprep.subr.bf16.mxu0 0
      %671 = vmatpush1.bf16.msra.mxu0 %v534
      %672 = vmatprep.subr.bf16.mxu0 0
      %673 = vmatpush1.bf16.msra.mxu0 0
      %674 = vmatprep.subr.bf16.mxu0 0
      %675 = vmatpush1.bf16.msra.mxu0 0
      %676 = vmatprep.subr.bf16.mxu0 0
      %677 = vmatpush1.bf16.msra.mxu0 0
      %678 = vmatprep.subr.bf16.mxu0 0
      %679 = vmatpush1.bf16.msra.mxu0 0
      %680 = vmatprep.subr.bf16.mxu0 0
      %681 = vmatpush1.bf16.msra.mxu0 0
      %682 = vmatprep.subr.bf16.mxu0 0
      %683 = vmatpush1.bf16.msra.mxu0 0
      %684 = vmatprep.subr.bf16.mxu0 0
      %685 = vmatpush1.bf16.msra.mxu0 0
      %686 = vmatprep.subr.bf16.mxu0 0
      %687 = vmatpush1.bf16.msra.mxu0 0
      %688 = vmatprep.mubr.bf16.mxu0 0
      %689 = vmatmul.mubr.bf16.gmra.mrb[0].mxu0 %v369
      %v690 = vpop.f32.mrb[0].mxu0
      %v691 = vadd.f32 %v594, %v690
      %v692 = vpop.f32.mrb[0].mxu0
      %v693 = vpop.f32.mrb[0].mxu0
      %v694 = vadd.f32 %v597, %v693
      %v695 = vpop.f32.mrb[0].mxu0
      %696 = vmatprep.mubr.bf16.mxu0 0
      %697 = vmatmul.mubr.bf16.gmra.mrb[0].mxu0 %v372
      %v698 = vpop.f32.mrb[0].mxu0
      %v699 = vadd.f32 %v602, %v698
      %v700 = vpop.f32.mrb[0].mxu0
      %v701 = vpop.f32.mrb[0].mxu0
      %v702 = vadd.f32 %v605, %v701
      %v703 = vpop.f32.mrb[0].mxu0
      %704 = vmatprep.mubr.bf16.mxu0 0
      %705 = vmatmul.mubr.bf16.gmra.mrb[0].mxu0 %v375
      %v706 = vpop.f32.mrb[0].mxu0
      %v707 = vadd.f32 %v610, %v706
      %v708 = vpop.f32.mrb[0].mxu0
      %v709 = vpop.f32.mrb[0].mxu0
      %v710 = vadd.f32 %v613, %v709
      %v711 = vpop.f32.mrb[0].mxu0
      %712 = vmatprep.mubr.bf16.mxu0 0
      %713 = vmatmul.mubr.bf16.gmra.mrb[0].mxu0 %v378
      %v714 = vpop.f32.mrb[0].mxu0
      %v715 = vadd.f32 %v618, %v714
      %v716 = vpop.f32.mrb[0].mxu0
      %v717 = vpop.f32.mrb[0].mxu0
      %v718 = vadd.f32 %v621, %v717
      %v719 = vpop.f32.mrb[0].mxu0
      %720 = vmatprep.mubr.bf16.mxu0 0
      %721 = vmatmul.mubr.bf16.gmra.mrb[0].mxu0 %v381
      %v722 = vpop.f32.mrb[0].mxu0
      %v723 = vadd.f32 %v626, %v722
      %v724 = vpop.f32.mrb[0].mxu0
      %v725 = vpop.f32.mrb[0].mxu0
      %v726 = vadd.f32 %v629, %v725
      %v727 = vpop.f32.mrb[0].mxu0
      %728 = vmatprep.mubr.bf16.mxu0 0
      %729 = vmatmul.mubr.bf16.gmra.mrb[0].mxu0 %v384
      %v730 = vpop.f32.mrb[0].mxu0
      %v731 = vadd.f32 %v634, %v730
      %v732 = vpop.f32.mrb[0].mxu0
      %v733 = vpop.f32.mrb[0].mxu0
      %v734 = vadd.f32 %v637, %v733
      %v735 = vpop.f32.mrb[0].mxu0
      %736 = vmatprep.mubr.bf16.mxu0 0
      %737 = vmatmul.mubr.bf16.gmra.mrb[0].mxu0 %v387
      %v738 = vpop.f32.mrb[0].mxu0
      %v739 = vadd.f32 %v642, %v738
      %v740 = vpop.f32.mrb[0].mxu0
      %v741 = vpop.f32.mrb[0].mxu0
      %v742 = vadd.f32 %v645, %v741
      %v743 = vpop.f32.mrb[0].mxu0
      %744 = vmatprep.mubr.bf16.mxu0 0
      %745 = vmatmul.mubr.bf16.gmra.mrb[0].mxu0 %v390
      %v746 = vpop.f32.mrb[0].mxu0
      %v747 = vadd.f32 %v650, %v746
      %v748 = vpop.f32.mrb[0].mxu0
      %v749 = vpop.f32.mrb[0].mxu0
      %v750 = vadd.f32 %v653, %v749
      %v751 = vpop.f32.mrb[0].mxu0
      %752 = vdwg.mxu0
      %v753 = vpack.c.bf16 %v694, %v691
      %v754 = vpack.c.bf16 %v702, %v699
      %v755 = vpack.c.bf16 %v710, %v707
      %v756 = vpack.c.bf16 %v718, %v715
      %v757 = vpack.c.bf16 %v726, %v723
      %v758 = vpack.c.bf16 %v734, %v731
      %v759 = vpack.c.bf16 %v742, %v739
      %v760 = vpack.c.bf16 %v750, %v747
      %v761 = vld [vmem:[%s2] sm:$0xff]
      %v762 = vld [vmem:[%s2 + $0x8] sm:$0xf]
      %v763 = vld [vmem:[%s2 + $0xc] sm:$0xff]
      %v764 = vld [vmem:[%s2 + $0x14] sm:$0xf]
      %v765 = vld [vmem:[%s2 + $0x18] sm:$0xff]
      %v766 = vld [vmem:[%s2 + $0x20] sm:$0xf]
      %v767 = vld [vmem:[%s2 + $0x24] sm:$0xff]
      %v768 = vld [vmem:[%s2 + $0x2c] sm:$0xf]
      %v769 = vld [vmem:[%s3] sm:$0x7]
      %v771 = vlaneseq
      %v772 = vshrl.u32 %v771, 7
      %v773 = vsub.s32 0, %v772
      %v774 = vrot.slane %v769, %v773
      %v775 = vlaneseq
      %v776 = vshrl.u32 %v775, 7
      %v777 = vsub.s32 1, %v776
      %v778 = vrot.slane %v769, %v777
      %v779 = vlaneseq
      %v780 = vshrl.u32 %v779, 7
      %v781 = vsub.s32 2, %v780
      %v782 = vrot.slane %v769, %v781
      %v794 = vunpack.c.l.b16 %v761
      %v795 = vunpack.c.h.b16 %v761
      %v796 = vunpack.c.l.b16 %v762
      %v797 = vunpack.c.l.b16 %v763
      %v798 = vunpack.c.h.b16 %v763
      %v799 = vunpack.c.l.b16 %v764
      %v800 = vunpack.c.l.b16 %v765
      %v801 = vunpack.c.h.b16 %v765
      %v802 = vunpack.c.l.b16 %v766
      %v803 = vunpack.c.l.b16 %v767
      %v804 = vunpack.c.h.b16 %v767
      %v805 = vunpack.c.l.b16 %v768
      %v806 = vpack.c.b16 %v797, %v794
      %v807 = vpack.c.b16 %v798, %v795
      %v808 = vpack.c.b16 %v799, %v796
      %v809 = vpack.c.b16 %v803, %v800
      %v810 = vpack.c.b16 %v804, %v801
      %v811 = vpack.c.b16 %v805, %v802
      %vm818 = vcmask 261120
      %v820 = vsel %vm818, %v753, 0
      %v823 = vsel %vm818, %v754, 0
      %v826 = vsel %vm818, %v755, 0
      %v829 = vsel %vm818, %v756, 0
      %v832 = vsel %vm818, %v757, 0
      %v835 = vsel %vm818, %v758, 0
      %v838 = vsel %vm818, %v759, 0
      %v841 = vsel %vm818, %v760, 0
      %843 = vmatprep.subr.bf16.mxu0 %v807
      %844 = vmatpush1.bf16.msra.mxu0 %v806
      %845 = vmatprep.subr.bf16.mxu0 %v810
      %846 = vmatpush1.bf16.msra.mxu0 %v809
      %847 = vmatprep.subr.bf16.mxu0 0
      %848 = vmatpush1.bf16.msra.mxu0 0
      %849 = vmatprep.subr.bf16.mxu0 0
      %850 = vmatpush1.bf16.msra.mxu0 0
      %851 = vmatprep.subr.bf16.mxu0 0
      %852 = vmatpush1.bf16.msra.mxu0 0
      %853 = vmatprep.subr.bf16.mxu0 0
      %854 = vmatpush1.bf16.msra.mxu0 0
      %855 = vmatprep.subr.bf16.mxu0 0
      %856 = vmatpush1.bf16.msra.mxu0 0
      %857 = vmatprep.subr.bf16.mxu0 0
      %858 = vmatpush1.bf16.msra.mxu0 0
      %859 = vmatprep.subr.bf16.mxu0 0
      %860 = vmatpush1.bf16.msra.mxu0 0
      %861 = vmatprep.subr.bf16.mxu0 0
      %862 = vmatpush1.bf16.msra.mxu0 0
      %863 = vmatprep.subr.bf16.mxu0 0
      %864 = vmatpush1.bf16.msra.mxu0 0
      %865 = vmatprep.subr.bf16.mxu0 0
      %866 = vmatpush1.bf16.msra.mxu0 0
      %867 = vmatprep.subr.bf16.mxu0 0
      %868 = vmatpush1.bf16.msra.mxu0 0
      %869 = vmatprep.subr.bf16.mxu0 0
      %870 = vmatpush1.bf16.msra.mxu0 0
      %871 = vmatprep.subr.bf16.mxu0 0
      %872 = vmatpush1.bf16.msra.mxu0 0
      %873 = vmatprep.subr.bf16.mxu0 0
      %874 = vmatpush1.bf16.msra.mxu0 0
      %875 = vmatprep.mubr.bf16.mxu0 0
      %876 = vmatmul.mubr.bf16.gmra.mrb[0].mxu0 %v820
      %v877 = vpop.f32.mrb[0].mxu0
      %v878 = vadd.f32 %v774, %v877
      %v879 = vpop.f32.mrb[0].mxu0
      %v880 = vadd.f32 %v778, %v879
      %v881 = vpop.f32.mrb[0].mxu0
      %v882 = vadd.f32 %v774, %v881
      %v883 = vpop.f32.mrb[0].mxu0
      %v884 = vadd.f32 %v778, %v883
      %885 = vmatprep.mubr.bf16.mxu0 0
      %886 = vmatmul.mubr.bf16.gmra.mrb[0].mxu0 %v823
      %v887 = vpop.f32.mrb[0].mxu0
      %v888 = vadd.f32 %v774, %v887
      %v889 = vpop.f32.mrb[0].mxu0
      %v890 = vadd.f32 %v778, %v889
      %v891 = vpop.f32.mrb[0].mxu0
      %v892 = vadd.f32 %v774, %v891
      %v893 = vpop.f32.mrb[0].mxu0
      %v894 = vadd.f32 %v778, %v893
      %895 = vmatprep.mubr.bf16.mxu0 0
      %896 = vmatmul.mubr.bf16.gmra.mrb[0].mxu0 %v826
      %v897 = vpop.f32.mrb[0].mxu0
      %v898 = vadd.f32 %v774, %v897
      %v899 = vpop.f32.mrb[0].mxu0
      %v900 = vadd.f32 %v778, %v899
      %v901 = vpop.f32.mrb[0].mxu0
      %v902 = vadd.f32 %v774, %v901
      %v903 = vpop.f32.mrb[0].mxu0
      %v904 = vadd.f32 %v778, %v903
      %905 = vmatprep.mubr.bf16.mxu0 0
      %906 = vmatmul.mubr.bf16.gmra.mrb[0].mxu0 %v829
      %v907 = vpop.f32.mrb[0].mxu0
      %v908 = vadd.f32 %v774, %v907
      %v909 = vpop.f32.mrb[0].mxu0
      %v910 = vadd.f32 %v778, %v909
      %v911 = vpop.f32.mrb[0].mxu0
      %v912 = vadd.f32 %v774, %v911
      %v913 = vpop.f32.mrb[0].mxu0
      %v914 = vadd.f32 %v778, %v913
      %915 = vmatprep.mubr.bf16.mxu0 0
      %916 = vmatmul.mubr.bf16.gmra.mrb[0].mxu0 %v832
      %v917 = vpop.f32.mrb[0].mxu0
      %v918 = vadd.f32 %v774, %v917
      %v919 = vpop.f32.mrb[0].mxu0
      %v920 = vadd.f32 %v778, %v919
      %v921 = vpop.f32.mrb[0].mxu0
      %v922 = vadd.f32 %v774, %v921
      %v923 = vpop.f32.mrb[0].mxu0
      %v924 = vadd.f32 %v778, %v923
      %925 = vmatprep.mubr.bf16.mxu0 0
      %926 = vmatmul.mubr.bf16.gmra.mrb[0].mxu0 %v835
      %v927 = vpop.f32.mrb[0].mxu0
      %v928 = vadd.f32 %v774, %v927
      %v929 = vpop.f32.mrb[0].mxu0
      %v930 = vadd.f32 %v778, %v929
      %v931 = vpop.f32.mrb[0].mxu0
      %v932 = vadd.f32 %v774, %v931
      %v933 = vpop.f32.mrb[0].mxu0
      %v934 = vadd.f32 %v778, %v933
      %935 = vmatprep.mubr.bf16.mxu0 0
      %936 = vmatmul.mubr.bf16.gmra.mrb[0].mxu0 %v838
      %v937 = vpop.f32.mrb[0].mxu0
      %v938 = vadd.f32 %v774, %v937
      %v939 = vpop.f32.mrb[0].mxu0
      %v940 = vadd.f32 %v778, %v939
      %v941 = vpop.f32.mrb[0].mxu0
      %v942 = vadd.f32 %v774, %v941
      %v943 = vpop.f32.mrb[0].mxu0
      %v944 = vadd.f32 %v778, %v943
      %945 = vmatprep.mubr.bf16.mxu0 0
      %946 = vmatmul.mubr.bf16.gmra.mrb[0].mxu0 %v841
      %v947 = vpop.f32.mrb[0].mxu0
      %v948 = vadd.f32 %v774, %v947
      %v949 = vpop.f32.mrb[0].mxu0
      %v950 = vadd.f32 %v778, %v949
      %v951 = vpop.f32.mrb[0].mxu0
      %v952 = vadd.f32 %v774, %v951
      %v953 = vpop.f32.mrb[0].mxu0
      %v954 = vadd.f32 %v778, %v953
      %955 = vdwg.mxu0
      %956 = vmatprep.subr.bf16.mxu0 0
      %957 = vmatpush1.bf16.msra.mxu0 %v808
      %958 = vmatprep.subr.bf16.mxu0 0
      %959 = vmatpush1.bf16.msra.mxu0 %v811
      %960 = vmatprep.subr.bf16.mxu0 0
      %961 = vmatpush1.bf16.msra.mxu0 0
      %962 = vmatprep.subr.bf16.mxu0 0
      %963 = vmatpush1.bf16.msra.mxu0 0
      %964 = vmatprep.subr.bf16.mxu0 0
      %965 = vmatpush1.bf16.msra.mxu0 0
      %966 = vmatprep.subr.bf16.mxu0 0
      %967 = vmatpush1.bf16.msra.mxu0 0
      %968 = vmatprep.subr.bf16.mxu0 0
      %969 = vmatpush1.bf16.msra.mxu0 0
      %970 = vmatprep.subr.bf16.mxu0 0
      %971 = vmatpush1.bf16.msra.mxu0 0
      %972 = vmatprep.subr.bf16.mxu0 0
      %973 = vmatpush1.bf16.msra.mxu0 0
      %974 = vmatprep.subr.bf16.mxu0 0
      %975 = vmatpush1.bf16.msra.mxu0 0
      %976 = vmatprep.subr.bf16.mxu0 0
      %977 = vmatpush1.bf16.msra.mxu0 0
      %978 = vmatprep.subr.bf16.mxu0 0
      %979 = vmatpush1.bf16.msra.mxu0 0
      %980 = vmatprep.subr.bf16.mxu0 0
      %981 = vmatpush1.bf16.msra.mxu0 0
      %982 = vmatprep.subr.bf16.mxu0 0
      %983 = vmatpush1.bf16.msra.mxu0 0
      %984 = vmatprep.subr.bf16.mxu0 0
      %985 = vmatpush1.bf16.msra.mxu0 0
      %986 = vmatprep.subr.bf16.mxu0 0
      %987 = vmatpush1.bf16.msra.mxu0 0
      %988 = vmatprep.mubr.bf16.mxu0 0
      %989 = vmatmul.mubr.bf16.gmra.mrb[0].mxu0 %v820
      %v990 = vpop.f32.mrb[0].mxu0
      %v991 = vadd.f32 %v782, %v990
      %v992 = vpop.f32.mrb[0].mxu0
      %v993 = vpop.f32.mrb[0].mxu0
      %v994 = vadd.f32 %v782, %v993
      %v995 = vpop.f32.mrb[0].mxu0
      %996 = vmatprep.mubr.bf16.mxu0 0
      %997 = vmatmul.mubr.bf16.gmra.mrb[0].mxu0 %v823
      %v998 = vpop.f32.mrb[0].mxu0
      %v999 = vadd.f32 %v782, %v998
      %v1000 = vpop.f32.mrb[0].mxu0
      %v1001 = vpop.f32.mrb[0].mxu0
      %v1002 = vadd.f32 %v782, %v1001
      %v1003 = vpop.f32.mrb[0].mxu0
      %1004 = vmatprep.mubr.bf16.mxu0 0
      %1005 = vmatmul.mubr.bf16.gmra.mrb[0].mxu0 %v826
      %v1006 = vpop.f32.mrb[0].mxu0
      %v1007 = vadd.f32 %v782, %v1006
      %v1008 = vpop.f32.mrb[0].mxu0
      %v1009 = vpop.f32.mrb[0].mxu0
      %v1010 = vadd.f32 %v782, %v1009
      %v1011 = vpop.f32.mrb[0].mxu0
      %1012 = vmatprep.mubr.bf16.mxu0 0
      %1013 = vmatmul.mubr.bf16.gmra.mrb[0].mxu0 %v829
      %v1014 = vpop.f32.mrb[0].mxu0
      %v1015 = vadd.f32 %v782, %v1014
      %v1016 = vpop.f32.mrb[0].mxu0
      %v1017 = vpop.f32.mrb[0].mxu0
      %v1018 = vadd.f32 %v782, %v1017
      %v1019 = vpop.f32.mrb[0].mxu0
      %1020 = vmatprep.mubr.bf16.mxu0 0
      %1021 = vmatmul.mubr.bf16.gmra.mrb[0].mxu0 %v832
      %v1022 = vpop.f32.mrb[0].mxu0
      %v1023 = vadd.f32 %v782, %v1022
      %v1024 = vpop.f32.mrb[0].mxu0
      %v1025 = vpop.f32.mrb[0].mxu0
      %v1026 = vadd.f32 %v782, %v1025
      %v1027 = vpop.f32.mrb[0].mxu0
      %1028 = vmatprep.mubr.bf16.mxu0 0
      %1029 = vmatmul.mubr.bf16.gmra.mrb[0].mxu0 %v835
      %v1030 = vpop.f32.mrb[0].mxu0
      %v1031 = vadd.f32 %v782, %v1030
      %v1032 = vpop.f32.mrb[0].mxu0
      %v1033 = vpop.f32.mrb[0].mxu0
      %v1034 = vadd.f32 %v782, %v1033
      %v1035 = vpop.f32.mrb[0].mxu0
      %1036 = vmatprep.mubr.bf16.mxu0 0
      %1037 = vmatmul.mubr.bf16.gmra.mrb[0].mxu0 %v838
      %v1038 = vpop.f32.mrb[0].mxu0
      %v1039 = vadd.f32 %v782, %v1038
      %v1040 = vpop.f32.mrb[0].mxu0
      %v1041 = vpop.f32.mrb[0].mxu0
      %v1042 = vadd.f32 %v782, %v1041
      %v1043 = vpop.f32.mrb[0].mxu0
      %1044 = vmatprep.mubr.bf16.mxu0 0
      %1045 = vmatmul.mubr.bf16.gmra.mrb[0].mxu0 %v841
      %v1046 = vpop.f32.mrb[0].mxu0
      %v1047 = vadd.f32 %v782, %v1046
      %v1048 = vpop.f32.mrb[0].mxu0
      %v1049 = vpop.f32.mrb[0].mxu0
      %v1050 = vadd.f32 %v782, %v1049
      %v1051 = vpop.f32.mrb[0].mxu0
      %1052 = vdwg.mxu0
      %v1053 = vmax.f32 %v878, %v880
      %v1054 = vmax.f32 %v1053, %v991
      %1055 = vmax.xlane.f32.xlu0 %v1054
      %v1056 = vpop.xlane.xlu0 %1055
      %v1057 = vmax.f32 %v882, %v884
      %v1058 = vmax.f32 %v1057, %v994
      %1059 = vmax.xlane.f32.xlu0 %v1058
      %v1060 = vpop.xlane.xlu0 %1059
      %v1061 = vmax.f32 %v888, %v890
      %v1062 = vmax.f32 %v1061, %v999
      %1063 = vmax.xlane.f32.xlu0 %v1062
      %v1064 = vpop.xlane.xlu0 %1063
      %v1065 = vmax.f32 %v892, %v894
      %v1066 = vmax.f32 %v1065, %v1002
      %1067 = vmax.xlane.f32.xlu0 %v1066
      %v1068 = vpop.xlane.xlu0 %1067
      %v1069 = vmax.f32 %v898, %v900
      %v1070 = vmax.f32 %v1069, %v1007
      %1071 = vmax.xlane.f32.xlu0 %v1070
      %v1072 = vpop.xlane.xlu0 %1071
      %v1073 = vmax.f32 %v902, %v904
      %v1074 = vmax.f32 %v1073, %v1010
      %1075 = vmax.xlane.f32.xlu0 %v1074
      %v1076 = vpop.xlane.xlu0 %1075
      %v1077 = vmax.f32 %v908, %v910
      %v1078 = vmax.f32 %v1077, %v1015
      %1079 = vmax.xlane.f32.xlu0 %v1078
      %v1080 = vpop.xlane.xlu0 %1079
      %v1081 = vmax.f32 %v912, %v914
      %v1082 = vmax.f32 %v1081, %v1018
      %1083 = vmax.xlane.f32.xlu0 %v1082
      %v1084 = vpop.xlane.xlu0 %1083
      %v1085 = vmax.f32 %v918, %v920
      %v1086 = vmax.f32 %v1085, %v1023
      %1087 = vmax.xlane.f32.xlu0 %v1086
      %v1088 = vpop.xlane.xlu0 %1087
      %v1089 = vmax.f32 %v922, %v924
      %v1090 = vmax.f32 %v1089, %v1026
      %1091 = vmax.xlane.f32.xlu0 %v1090
      %v1092 = vpop.xlane.xlu0 %1091
      %v1093 = vmax.f32 %v928, %v930
      %v1094 = vmax.f32 %v1093, %v1031
      %1095 = vmax.xlane.f32.xlu0 %v1094
      %v1096 = vpop.xlane.xlu0 %1095
      %v1097 = vmax.f32 %v932, %v934
      %v1098 = vmax.f32 %v1097, %v1034
      %1099 = vmax.xlane.f32.xlu0 %v1098
      %v1100 = vpop.xlane.xlu0 %1099
      %v1101 = vmax.f32 %v938, %v940
      %v1102 = vmax.f32 %v1101, %v1039
      %1103 = vmax.xlane.f32.xlu0 %v1102
      %v1104 = vpop.xlane.xlu0 %1103
      %v1105 = vmax.f32 %v942, %v944
      %v1106 = vmax.f32 %v1105, %v1042
      %1107 = vmax.xlane.f32.xlu0 %v1106
      %v1108 = vpop.xlane.xlu0 %1107
      %v1109 = vmax.f32 %v948, %v950
      %v1110 = vmax.f32 %v1109, %v1047
      %1111 = vmax.xlane.f32.xlu0 %v1110
      %v1112 = vpop.xlane.xlu0 %1111
      %v1113 = vmax.f32 %v952, %v954
      %v1114 = vmax.f32 %v1113, %v1050
      %1115 = vmax.xlane.f32.xlu0 %v1114
      %v1116 = vpop.xlane.xlu0 %1115
      %v1117 = vsub.f32 %v878, %v1056
      %v1118 = vsub.f32 %v880, %v1056
      %v1119 = vsub.f32 %v991, %v1056
      %v1120 = vsub.f32 %v882, %v1060
      %v1121 = vsub.f32 %v884, %v1060
      %v1122 = vsub.f32 %v994, %v1060
      %v1123 = vsub.f32 %v888, %v1064
      %v1124 = vsub.f32 %v890, %v1064
      %v1125 = vsub.f32 %v999, %v1064
      %v1126 = vsub.f32 %v892, %v1068
      %v1127 = vsub.f32 %v894, %v1068
      %v1128 = vsub.f32 %v1002, %v1068
      %v1129 = vsub.f32 %v898, %v1072
      %v1130 = vsub.f32 %v900, %v1072
      %v1131 = vsub.f32 %v1007, %v1072
      %v1132 = vsub.f32 %v902, %v1076
      %v1133 = vsub.f32 %v904, %v1076
      %v1134 = vsub.f32 %v1010, %v1076
      %v1135 = vsub.f32 %v908, %v1080
      %v1136 = vsub.f32 %v910, %v1080
      %v1137 = vsub.f32 %v1015, %v1080
      %v1138 = vsub.f32 %v912, %v1084
      %v1139 = vsub.f32 %v914, %v1084
      %v1140 = vsub.f32 %v1018, %v1084
      %v1141 = vsub.f32 %v918, %v1088
      %v1142 = vsub.f32 %v920, %v1088
      %v1143 = vsub.f32 %v1023, %v1088
      %v1144 = vsub.f32 %v922, %v1092
      %v1145 = vsub.f32 %v924, %v1092
      %v1146 = vsub.f32 %v1026, %v1092
      %v1147 = vsub.f32 %v928, %v1096
      %v1148 = vsub.f32 %v930, %v1096
      %v1149 = vsub.f32 %v1031, %v1096
      %v1150 = vsub.f32 %v932, %v1100
      %v1151 = vsub.f32 %v934, %v1100
      %v1152 = vsub.f32 %v1034, %v1100
      %v1153 = vsub.f32 %v938, %v1104
      %v1154 = vsub.f32 %v940, %v1104
      %v1155 = vsub.f32 %v1039, %v1104
      %v1156 = vsub.f32 %v942, %v1108
      %v1157 = vsub.f32 %v944, %v1108
      %v1158 = vsub.f32 %v1042, %v1108
      %v1159 = vsub.f32 %v948, %v1112
      %v1160 = vsub.f32 %v950, %v1112
      %v1161 = vsub.f32 %v1047, %v1112
      %v1162 = vsub.f32 %v952, %v1116
      %v1163 = vsub.f32 %v954, %v1116
      %v1164 = vsub.f32 %v1050, %v1116
      %v1165 = vmul.f32 %v1117, 1.442695
      %v1166 = vpow.pop %v1165
      %v1167 = vmul.f32 %v1118, 1.442695
      %v1168 = vpow.pop %v1167
      %v1169 = vmul.f32 %v1119, 1.442695
      %v1170 = vpow.pop %v1169
      %v1171 = vmul.f32 %v1120, 1.442695
      %v1172 = vpow.pop %v1171
      %v1173 = vmul.f32 %v1121, 1.442695
      %v1174 = vpow.pop %v1173
      %v1175 = vmul.f32 %v1122, 1.442695
      %v1176 = vpow.pop %v1175
      %v1177 = vmul.f32 %v1123, 1.442695
      %v1178 = vpow.pop %v1177
      %v1179 = vmul.f32 %v1124, 1.442695
      %v1180 = vpow.pop %v1179
      %v1181 = vmul.f32 %v1125, 1.442695
      %v1182 = vpow.pop %v1181
      %v1183 = vmul.f32 %v1126, 1.442695
      %v1184 = vpow.pop %v1183
      %v1185 = vmul.f32 %v1127, 1.442695
      %v1186 = vpow.pop %v1185
      %v1187 = vmul.f32 %v1128, 1.442695
      %v1188 = vpow.pop %v1187
      %v1189 = vmul.f32 %v1129, 1.442695
      %v1190 = vpow.pop %v1189
      %v1191 = vmul.f32 %v1130, 1.442695
      %v1192 = vpow.pop %v1191
      %v1193 = vmul.f32 %v1131, 1.442695
      %v1194 = vpow.pop %v1193
      %v1195 = vmul.f32 %v1132, 1.442695
      %v1196 = vpow.pop %v1195
      %v1197 = vmul.f32 %v1133, 1.442695
      %v1198 = vpow.pop %v1197
      %v1199 = vmul.f32 %v1134, 1.442695
      %v1200 = vpow.pop %v1199
      %v1201 = vmul.f32 %v1135, 1.442695
      %v1202 = vpow.pop %v1201
      %v1203 = vmul.f32 %v1136, 1.442695
      %v1204 = vpow.pop %v1203
      %v1205 = vmul.f32 %v1137, 1.442695
      %v1206 = vpow.pop %v1205
      %v1207 = vmul.f32 %v1138, 1.442695
      %v1208 = vpow.pop %v1207
      %v1209 = vmul.f32 %v1139, 1.442695
      %v1210 = vpow.pop %v1209
      %v1211 = vmul.f32 %v1140, 1.442695
      %v1212 = vpow.pop %v1211
      %v1213 = vmul.f32 %v1141, 1.442695
      %v1214 = vpow.pop %v1213
      %v1215 = vmul.f32 %v1142, 1.442695
      %v1216 = vpow.pop %v1215
      %v1217 = vmul.f32 %v1143, 1.442695
      %v1218 = vpow.pop %v1217
      %v1219 = vmul.f32 %v1144, 1.442695
      %v1220 = vpow.pop %v1219
      %v1221 = vmul.f32 %v1145, 1.442695
      %v1222 = vpow.pop %v1221
      %v1223 = vmul.f32 %v1146, 1.442695
      %v1224 = vpow.pop %v1223
      %v1225 = vmul.f32 %v1147, 1.442695
      %v1226 = vpow.pop %v1225
      %v1227 = vmul.f32 %v1148, 1.442695
      %v1228 = vpow.pop %v1227
      %v1229 = vmul.f32 %v1149, 1.442695
      %v1230 = vpow.pop %v1229
      %v1231 = vmul.f32 %v1150, 1.442695
      %v1232 = vpow.pop %v1231
      %v1233 = vmul.f32 %v1151, 1.442695
      %v1234 = vpow.pop %v1233
      %v1235 = vmul.f32 %v1152, 1.442695
      %v1236 = vpow.pop %v1235
      %v1237 = vmul.f32 %v1153, 1.442695
      %v1238 = vpow.pop %v1237
      %v1239 = vmul.f32 %v1154, 1.442695
      %v1240 = vpow.pop %v1239
      %v1241 = vmul.f32 %v1155, 1.442695
      %v1242 = vpow.pop %v1241
      %v1243 = vmul.f32 %v1156, 1.442695
      %v1244 = vpow.pop %v1243
      %v1245 = vmul.f32 %v1157, 1.442695
      %v1246 = vpow.pop %v1245
      %v1247 = vmul.f32 %v1158, 1.442695
      %v1248 = vpow.pop %v1247
      %v1249 = vmul.f32 %v1159, 1.442695
      %v1250 = vpow.pop %v1249
      %v1251 = vmul.f32 %v1160, 1.442695
      %v1252 = vpow.pop %v1251
      %v1253 = vmul.f32 %v1161, 1.442695
      %v1254 = vpow.pop %v1253
      %v1255 = vmul.f32 %v1162, 1.442695
      %v1256 = vpow.pop %v1255
      %v1257 = vmul.f32 %v1163, 1.442695
      %v1258 = vpow.pop %v1257
      %v1259 = vmul.f32 %v1164, 1.442695
      %v1260 = vpow.pop %v1259
      %v1261 = vadd.f32 %v1166, %v1168
      %v1262 = vadd.f32 %v1261, %v1170
      %1263 = vadd.xlane.f32.xlu0 %v1262
      %v1264 = vpop.xlane.xlu0 %1263
      %v1265 = vadd.f32 %v1172, %v1174
      %v1266 = vadd.f32 %v1265, %v1176
      %1267 = vadd.xlane.f32.xlu0 %v1266
      %v1268 = vpop.xlane.xlu0 %1267
      %v1269 = vadd.f32 %v1178, %v1180
      %v1270 = vadd.f32 %v1269, %v1182
      %1271 = vadd.xlane.f32.xlu0 %v1270
      %v1272 = vpop.xlane.xlu0 %1271
      %v1273 = vadd.f32 %v1184, %v1186
      %v1274 = vadd.f32 %v1273, %v1188
      %1275 = vadd.xlane.f32.xlu0 %v1274
      %v1276 = vpop.xlane.xlu0 %1275
      %v1277 = vadd.f32 %v1190, %v1192
      %v1278 = vadd.f32 %v1277, %v1194
      %1279 = vadd.xlane.f32.xlu0 %v1278
      %v1280 = vpop.xlane.xlu0 %1279
      %v1281 = vadd.f32 %v1196, %v1198
      %v1282 = vadd.f32 %v1281, %v1200
      %1283 = vadd.xlane.f32.xlu0 %v1282
      %v1284 = vpop.xlane.xlu0 %1283
      %v1285 = vadd.f32 %v1202, %v1204
      %v1286 = vadd.f32 %v1285, %v1206
      %1287 = vadd.xlane.f32.xlu0 %v1286
      %v1288 = vpop.xlane.xlu0 %1287
      %v1289 = vadd.f32 %v1208, %v1210
      %v1290 = vadd.f32 %v1289, %v1212
      %1291 = vadd.xlane.f32.xlu0 %v1290
      %v1292 = vpop.xlane.xlu0 %1291
      %v1293 = vadd.f32 %v1214, %v1216
      %v1294 = vadd.f32 %v1293, %v1218
      %1295 = vadd.xlane.f32.xlu0 %v1294
      %v1296 = vpop.xlane.xlu0 %1295
      %v1297 = vadd.f32 %v1220, %v1222
      %v1298 = vadd.f32 %v1297, %v1224
      %1299 = vadd.xlane.f32.xlu0 %v1298
      %v1300 = vpop.xlane.xlu0 %1299
      %v1301 = vadd.f32 %v1226, %v1228
      %v1302 = vadd.f32 %v1301, %v1230
      %1303 = vadd.xlane.f32.xlu0 %v1302
      %v1304 = vpop.xlane.xlu0 %1303
      %v1305 = vadd.f32 %v1232, %v1234
      %v1306 = vadd.f32 %v1305, %v1236
      %1307 = vadd.xlane.f32.xlu0 %v1306
      %v1308 = vpop.xlane.xlu0 %1307
      %v1309 = vadd.f32 %v1238, %v1240
      %v1310 = vadd.f32 %v1309, %v1242
      %1311 = vadd.xlane.f32.xlu0 %v1310
      %v1312 = vpop.xlane.xlu0 %1311
      %v1313 = vadd.f32 %v1244, %v1246
      %v1314 = vadd.f32 %v1313, %v1248
      %1315 = vadd.xlane.f32.xlu0 %v1314
      %v1316 = vpop.xlane.xlu0 %1315
      %v1317 = vadd.f32 %v1250, %v1252
      %v1318 = vadd.f32 %v1317, %v1254
      %1319 = vadd.xlane.f32.xlu0 %v1318
      %v1320 = vpop.xlane.xlu0 %1319
      %v1321 = vadd.f32 %v1256, %v1258
      %v1322 = vadd.f32 %v1321, %v1260
      %1323 = vadd.xlane.f32.xlu0 %v1322
      %v1324 = vpop.xlane.xlu0 %1323
      %v1325 = vlog2.pop %v1264
      %v1326 = vmul.f32 %v1325, 0.6931472
      %v1327 = vlog2.pop %v1268
      %v1328 = vmul.f32 %v1327, 0.6931472
      %v1329 = vlog2.pop %v1272
      %v1330 = vmul.f32 %v1329, 0.6931472
      %v1331 = vlog2.pop %v1276
      %v1332 = vmul.f32 %v1331, 0.6931472
      %v1333 = vlog2.pop %v1280
      %v1334 = vmul.f32 %v1333, 0.6931472
      %v1335 = vlog2.pop %v1284
      %v1336 = vmul.f32 %v1335, 0.6931472
      %v1337 = vlog2.pop %v1288
      %v1338 = vmul.f32 %v1337, 0.6931472
      %v1339 = vlog2.pop %v1292
      %v1340 = vmul.f32 %v1339, 0.6931472
      %v1341 = vlog2.pop %v1296
      %v1342 = vmul.f32 %v1341, 0.6931472
      %v1343 = vlog2.pop %v1300
      %v1344 = vmul.f32 %v1343, 0.6931472
      %v1345 = vlog2.pop %v1304
      %v1346 = vmul.f32 %v1345, 0.6931472
      %v1347 = vlog2.pop %v1308
      %v1348 = vmul.f32 %v1347, 0.6931472
      %v1349 = vlog2.pop %v1312
      %v1350 = vmul.f32 %v1349, 0.6931472
      %v1351 = vlog2.pop %v1316
      %v1352 = vmul.f32 %v1351, 0.6931472
      %v1353 = vlog2.pop %v1320
      %v1354 = vmul.f32 %v1353, 0.6931472
      %v1355 = vlog2.pop %v1324
      %v1356 = vmul.f32 %v1355, 0.6931472
      %v1357 = vadd.f32 %v1056, %v1326
      %v1358 = vadd.f32 %v1060, %v1328
      %v1359 = vadd.f32 %v1064, %v1330
      %v1360 = vadd.f32 %v1068, %v1332
      %v1361 = vadd.f32 %v1072, %v1334
      %v1362 = vadd.f32 %v1076, %v1336
      %v1363 = vadd.f32 %v1080, %v1338
      %v1364 = vadd.f32 %v1084, %v1340
      %v1365 = vadd.f32 %v1088, %v1342
      %v1366 = vadd.f32 %v1092, %v1344
      %v1367 = vadd.f32 %v1096, %v1346
      %v1368 = vadd.f32 %v1100, %v1348
      %v1369 = vadd.f32 %v1104, %v1350
      %v1370 = vadd.f32 %v1108, %v1352
      %v1371 = vadd.f32 %v1112, %v1354
      %v1372 = vadd.f32 %v1116, %v1356
      %v1373 = vsub.f32 %v878, %v1357
      %v1374 = vsub.f32 %v880, %v1357
      %v1375 = vsub.f32 %v991, %v1357
      %v1376 = vsub.f32 %v882, %v1358
      %v1377 = vsub.f32 %v884, %v1358
      %v1378 = vsub.f32 %v994, %v1358
      %v1379 = vsub.f32 %v888, %v1359
      %v1380 = vsub.f32 %v890, %v1359
      %v1381 = vsub.f32 %v999, %v1359
      %v1382 = vsub.f32 %v892, %v1360
      %v1383 = vsub.f32 %v894, %v1360
      %v1384 = vsub.f32 %v1002, %v1360
      %v1385 = vsub.f32 %v898, %v1361
      %v1386 = vsub.f32 %v900, %v1361
      %v1387 = vsub.f32 %v1007, %v1361
      %v1388 = vsub.f32 %v902, %v1362
      %v1389 = vsub.f32 %v904, %v1362
      %v1390 = vsub.f32 %v1010, %v1362
      %v1391 = vsub.f32 %v908, %v1363
      %v1392 = vsub.f32 %v910, %v1363
      %v1393 = vsub.f32 %v1015, %v1363
      %v1394 = vsub.f32 %v912, %v1364
      %v1395 = vsub.f32 %v914, %v1364
      %v1396 = vsub.f32 %v1018, %v1364
      %v1397 = vsub.f32 %v918, %v1365
      %v1398 = vsub.f32 %v920, %v1365
      %v1399 = vsub.f32 %v1023, %v1365
      %v1400 = vsub.f32 %v922, %v1366
      %v1401 = vsub.f32 %v924, %v1366
      %v1402 = vsub.f32 %v1026, %v1366
      %v1403 = vsub.f32 %v928, %v1367
      %v1404 = vsub.f32 %v930, %v1367
      %v1405 = vsub.f32 %v1031, %v1367
      %v1406 = vsub.f32 %v932, %v1368
      %v1407 = vsub.f32 %v934, %v1368
      %v1408 = vsub.f32 %v1034, %v1368
      %v1409 = vsub.f32 %v938, %v1369
      %v1410 = vsub.f32 %v940, %v1369
      %v1411 = vsub.f32 %v1039, %v1369
      %v1412 = vsub.f32 %v942, %v1370
      %v1413 = vsub.f32 %v944, %v1370
      %v1414 = vsub.f32 %v1042, %v1370
      %v1415 = vsub.f32 %v948, %v1371
      %v1416 = vsub.f32 %v950, %v1371
      %v1417 = vsub.f32 %v1047, %v1371
      %v1418 = vsub.f32 %v952, %v1372
      %v1419 = vsub.f32 %v954, %v1372
      %v1420 = vsub.f32 %v1050, %v1372
      %1421 = vst [vmem:[%s204] sm:$0xff] %v1373
      %1422 = vst [vmem:[%s204 + $0x8] sm:$0xff] %v1374
      %1423 = vst [vmem:[%s204 + $0x10] sm:$0xff] %v1375
      %1424 = vst [vmem:[%s204 + $0x18] sm:$0xff] %v1376
      %1425 = vst [vmem:[%s204 + $0x20] sm:$0xff] %v1377
      %1426 = vst [vmem:[%s204 + $0x28] sm:$0xff] %v1378
      %1427 = vst [vmem:[%s204 + $0x30] sm:$0xff] %v1379
      %1428 = vst [vmem:[%s204 + $0x38] sm:$0xff] %v1380
      %1429 = vst [vmem:[%s204 + $0x40] sm:$0xff] %v1381
      %1430 = vst [vmem:[%s204 + $0x48] sm:$0xff] %v1382
      %1431 = vst [vmem:[%s204 + $0x50] sm:$0xff] %v1383
      %1432 = vst [vmem:[%s204 + $0x58] sm:$0xff] %v1384
      %1433 = vst [vmem:[%s204 + $0x60] sm:$0xff] %v1385
      %1434 = vst [vmem:[%s204 + $0x68] sm:$0xff] %v1386
      %1435 = vst [vmem:[%s204 + $0x70] sm:$0xff] %v1387
      %1436 = vst [vmem:[%s204 + $0x78] sm:$0xff] %v1388
      %1437 = vst [vmem:[%s204 + $0x80] sm:$0xff] %v1389
      %1438 = vst [vmem:[%s204 + $0x88] sm:$0xff] %v1390
      %1439 = vst [vmem:[%s204 + $0x90] sm:$0xff] %v1391
      %1440 = vst [vmem:[%s204 + $0x98] sm:$0xff] %v1392
      %1441 = vst [vmem:[%s204 + $0xa0] sm:$0xff] %v1393
      %1442 = vst [vmem:[%s204 + $0xa8] sm:$0xff] %v1394
      %1443 = vst [vmem:[%s204 + $0xb0] sm:$0xff] %v1395
      %1444 = vst [vmem:[%s204 + $0xb8] sm:$0xff] %v1396
      %1445 = vst [vmem:[%s204 + $0xc0] sm:$0xff] %v1397
      %1446 = vst [vmem:[%s204 + $0xc8] sm:$0xff] %v1398
      %1447 = vst [vmem:[%s204 + $0xd0] sm:$0xff] %v1399
      %1448 = vst [vmem:[%s204 + $0xd8] sm:$0xff] %v1400
      %1449 = vst [vmem:[%s204 + $0xe0] sm:$0xff] %v1401
      %1450 = vst [vmem:[%s204 + $0xe8] sm:$0xff] %v1402
      %1451 = vst [vmem:[%s204 + $0xf0] sm:$0xff] %v1403
      %1452 = vst [vmem:[%s204 + $0xf8] sm:$0xff] %v1404
      %1453 = vst [vmem:[%s204 + $0x100] sm:$0xff] %v1405
      %1454 = vst [vmem:[%s204 + $0x108] sm:$0xff] %v1406
      %1455 = vst [vmem:[%s204 + $0x110] sm:$0xff] %v1407
      %1456 = vst [vmem:[%s204 + $0x118] sm:$0xff] %v1408
      %1457 = vst [vmem:[%s204 + $0x120] sm:$0xff] %v1409
      %1458 = vst [vmem:[%s204 + $0x128] sm:$0xff] %v1410
      %1459 = vst [vmem:[%s204 + $0x130] sm:$0xff] %v1411
      %1460 = vst [vmem:[%s204 + $0x138] sm:$0xff] %v1412
      %1461 = vst [vmem:[%s204 + $0x140] sm:$0xff] %v1413
      %1462 = vst [vmem:[%s204 + $0x148] sm:$0xff] %v1414
      %1463 = vst [vmem:[%s204 + $0x150] sm:$0xff] %v1415
      %1464 = vst [vmem:[%s204 + $0x158] sm:$0xff] %v1416
      %1465 = vst [vmem:[%s204 + $0x160] sm:$0xff] %v1417
      %1466 = vst [vmem:[%s204 + $0x168] sm:$0xff] %v1418
      %1467 = vst [vmem:[%s204 + $0x170] sm:$0xff] %v1419
      %1468 = vst [vmem:[%s204 + $0x178] sm:$0xff] %v1420
      %s1469 = smul.u32 16, %s15
      %p1470 = scmp.lt.s32.totalorder %s1469, 31
      %s1471 = scalar_select %p1470, %s1469, 31
      %s1472 = smul.addr %s1471, 3
      %s1473 = smul.addr %s1472, 8
      %s1474 = scalar_lea.vmem %s4, %s1473
      // Predicated region
      $region37: #{deepwalk_forward.1} parent=35 // pred_check
        %p1475 = pneg %p122
      $region38: #{deepwalk_forward.1} parent=35 // pred_check_branch
        %1477 = sbr.rel (%p1475) target = $region40
      $region39: #{deepwalk_forward.1} parent=35 // pred_region
        %s1478 = smul.u32 16, %s15
      $region40: #{deepwalk_forward.1} parent=35 // pred_fallthru
        _
    $region36: #{deepwalk_forward.1} parent=5 // pred_fallthru
      _
    %p1479 = scmp.le.s32.totalorder 2, %s10
    // Predicated region
    $region41: #{deepwalk_forward.1} parent=5 // pred_check
      %p1480 = pneg %p1479
    $region42: #{deepwalk_forward.1} parent=5 // pred_check_branch
      %1482 = sbr.rel (%p1480) target = $region44
    $region43: #{deepwalk_forward.1} parent=5 // pred_region
      %s1483 = ssub.s32 %s10, 2
      // Predicated region
      $region45: #{deepwalk_forward.1} parent=43 // pred_check
        %p1484 = pneg %p128
      $region46: #{deepwalk_forward.1} parent=43 // pred_check_branch
        %1486 = sbr.rel (%p1484) target = $region48
      $region47: #{deepwalk_forward.1} parent=43 // pred_region
        %s1487 = smul.u32 16, %s16
        %p1488 = scmp.lt.s32.totalorder %s1487, 31
        %s1489 = scalar_select %p1488, %s1487, 31
        %s1490 = smul.addr %s1489, 3
        %s1491 = smul.addr %s1490, 8
        %s1492 = scalar_lea.vmem %s4, %s1491
      $region48: #{deepwalk_forward.1} parent=43 // pred_fallthru
        _
    $region44: #{deepwalk_forward.1} parent=5 // pred_fallthru
      _
  $region6: #{deepwalk_forward.1} parent=0 // loop_footer
    %s14 = sadd.s32 1, %s10
  $region7: #{deepwalk_forward.1} parent=0 // loop_footer_branch
    %9 = sbr.rel target = $region3
  $region8: #{deepwalk_forward.1} parent=0 // loop_exit
    _

</llo_original>
